<compile_context>
chip_gen: v7x
topology: tpu7x:2x2x1
jax: 0.10.0
libtpu: 0.0.40
codegen_flags: <defaults>
</compile_context>

<pallas_src>
import functools
import math

import jax
import jax.numpy as jnp
from jax.experimental import pallas as pl
from jax.experimental.pallas import tpu as pltpu


def self_attention_kernel(feats_ref, wqT_ref, bq_ref, wkT_ref, bk_ref,
                          wvT_ref, bv_ref, wmask_ref, out_ref):
    # feats_ref: (TB, L, F) block of the batch; weights already transposed to (in, out).
    TB, L, F = feats_ref.shape

    # Fold TB*L rows into one matmul per projection so the MXU M-dim is TB*L, not L.
    x = feats_ref[...].reshape(TB * L, F)

    q = jnp.dot(x, wqT_ref[...], preferred_element_type=jnp.float32) + bq_ref[...]
    k = jnp.dot(x, wkT_ref[...], preferred_element_type=jnp.float32) + bk_ref[...]
    v = jnp.dot(x, wvT_ref[...], preferred_element_type=jnp.float32) + bv_ref[...]

    q3 = q.reshape(TB, L, F)
    k3 = k.reshape(TB, L, F)
    v3 = v.reshape(TB, L, F)

    # dot = QK^T / sqrt(2048)  (hard-coded 2048, exactly as in the torch module)
    scale = 1.0 / math.sqrt(2048.0)
    s = jnp.einsum("bld,bmd->blm", q3, k3,
                   preferred_element_type=jnp.float32) * scale        # (TB, L, L)

    # Numerically stable softmax over the key axis; reciprocal on the EUP slot.
    s = s - jnp.max(s, axis=-1, keepdims=True)
    e = jnp.exp(s)
    w = e * pl.reciprocal(jnp.sum(e, axis=-1, keepdims=True), approx=True)

    # Reassociated final contraction: out = (wmask @ weight) @ V
    #   r  : (TB, 1, L) = wmask (1, L) applied to each batch's attention matrix
    #   out: (TB, 1, F)
    wm = jnp.broadcast_to(wmask_ref[...].reshape(1, 1, L), (TB, 1, L))
    r = jnp.einsum("bql,blm->bqm", wm, w, preferred_element_type=jnp.float32)
    o = jnp.einsum("bqm,bmf->bqf", r, v3, preferred_element_type=jnp.float32)

    out_ref[...] = o[:, 0, :]                                          # (TB, F)


def _pick_tb(B, L, target_rows=256, min_steps=2):
    """Largest divisor of B such that TB*L roughly fills the MXU M-dim while
    keeping at least `min_steps` grid steps (so both v7x TensorCores get work)."""
    cap = max(1, B // min_steps) if B >= min_steps else B
    want = max(1, min(cap, -(-target_rows // L)))
    for tb in range(want, 0, -1):
        if B % tb == 0:
            return tb
    return 1


def soft_nsa_self_attention(feats, wq, bq, wk, bk, wv, bv, wfc, bfc, mask, *, tb=None):
    """feats: (B, L, F); w*: (F, F) PyTorch-style (out, in); b*: (1, F);
    wfc: (L, L); bfc: (1, L); mask: (1, L).
    Returns (B, 1, F), matching the torch module's soft_nsa output."""
    B, L, F = feats.shape

    # Batch-invariant mask path hoisted out of the kernel (mask is all ones in the
    # torch module, so the weighted mask is identical for every batch element).
    wmask = jax.nn.softmax(mask @ wfc.T + bfc, axis=-1)                # (1, L)

    # Pre-transpose projection weights once (layout plumbing, no in-kernel .T).
    wqT, wkT, wvT = wq.T, wk.T, wv.T

    if tb is None:
        tb = _pick_tb(B, L)
    assert B % tb == 0, f"batch {B} must be divisible by tile {tb}"

    w_spec = pl.BlockSpec((F, F), lambda b: (0, 0))
    b_spec = pl.BlockSpec((1, F), lambda b: (0, 0))

    out = pl.pallas_call(
        self_attention_kernel,
        out_shape=jax.ShapeDtypeStruct((B, F), jnp.float32),
        grid_spec=pltpu.PrefetchScalarGridSpec(
            num_scalar_prefetch=0,
            grid=(B // tb,),
            in_specs=[
                pl.BlockSpec((tb, L, F), lambda b: (b, 0, 0)),  # feats (TB batch block)
                w_spec, b_spec,                                  # Wq^T, bq
                w_spec, b_spec,                                  # Wk^T, bk
                w_spec, b_spec,                                  # Wv^T, bv
                pl.BlockSpec((1, L), lambda b: (0, 0)),          # weighted mask
            ],
            out_specs=pl.BlockSpec((tb, F), lambda b: (b, 0)),
        ),
        compiler_params=pltpu.CompilerParams(dimension_semantics=("parallel",)),
    )(feats, wqT, bq, wkT, bk, wvT, bv, wmask)

    # Match torch output shape (B, 1, F); free reshape outside the kernel.
    return out.reshape(B, 1, F)


def reference(feats, wq, bq, wk, bk, wv, bv, wfc, bfc, mask):
    q = feats @ wq.T + bq
    k = feats @ wk.T + bk
    v = feats @ wv.T + bv
    dot = jnp.einsum("blf,bmf->blm", q, k) / math.sqrt(2048.0)
    w = jax.nn.softmax(dot, axis=-1)
    new = jnp.einsum("blm,bmf->blf", w, v)
    wm = jax.nn.softmax(mask @ wfc.T + bfc, axis=-1)                   # (1, L)
    out = jnp.einsum("l,blf->bf", wm[0], new)
    return out[:, None, :]                                             # (B, 1, F)


if __name__ == "__main__":
    # Small shapes consistent with the module:
    #   batch B = 16, feats_size F = 32, neighbor_size L = 8
    B, L, F = 16, 8, 32

    key = jax.random.PRNGKey(0)
    keys = jax.random.split(key, 9)

    def linear_init(kw, kb, out_f, in_f):
        bound = 1.0 / math.sqrt(in_f)
        w = jax.random.uniform(kw, (out_f, in_f), jnp.float32, -bound, bound)
        b = jax.random.uniform(kb, (1, out_f), jnp.float32, -bound, bound)
        return w, b

    wq, bq = linear_init(keys[0], keys[1], F, F)
    wk, bk = linear_init(keys[2], keys[3], F, F)
    wv, bv = linear_init(keys[4], keys[5], F, F)
    wfc, bfc = linear_init(keys[6], keys[7], L, L)

    feats = jax.random.normal(keys[8], (B, L, F), jnp.float32)
    mask = jnp.ones((1, L), jnp.float32)  # torch uses ones(batch, 1, L); per-batch identical

    fn = jax.jit(soft_nsa_self_attention)
    out = fn(feats, wq, bq, wk, bk, wv, bv, wfc, bfc, mask)
    out = jax.block_until_ready(out)

    ref = reference(feats, wq, bq, wk, bk, wv, bv, wfc, bfc, mask)
    assert out.shape == (B, 1, F), f"bad output shape {out.shape}"
    assert jnp.allclose(out, ref, atol=1e-3, rtol=1e-3), (
        f"mismatch vs reference, max abs diff {jnp.max(jnp.abs(out - ref))}")

    print("KERNEL_OK")
</pallas_src>

<mosaic_0001>
module attributes {stable_mosaic.version = 11 : i64} {
  func.func @self_attention_kernel(%arg0: i32, %arg1: memref<8x8x32xf32, #tpu.memory_space<vmem>>, %arg2: memref<32x32xf32, #tpu.memory_space<vmem>>, %arg3: memref<1x32xf32, #tpu.memory_space<vmem>>, %arg4: memref<32x32xf32, #tpu.memory_space<vmem>>, %arg5: memref<1x32xf32, #tpu.memory_space<vmem>>, %arg6: memref<32x32xf32, #tpu.memory_space<vmem>>, %arg7: memref<1x32xf32, #tpu.memory_space<vmem>>, %arg8: memref<1x8xf32, #tpu.memory_space<vmem>>, %arg9: memref<8x32xf32, #tpu.memory_space<vmem>>) attributes {dimension_semantics = [#tpu.dimension_semantics<parallel>], iteration_bounds = array<i64: 2>, scalar_prefetch = 0 : i64, scratch_operands = 0 : i64, tpu.core_type = #tpu.core_type<tc>, window_params = [{transform_indices = @transform_0, window_bounds = array<i64: 8, 8, 32>}, {pipeline_mode = #tpu.pipeline_mode<synchronous>, transform_indices = @transform_1, window_bounds = array<i64: 32, 32>}, {pipeline_mode = #tpu.pipeline_mode<synchronous>, transform_indices = @transform_2, window_bounds = array<i64: 1, 32>}, {pipeline_mode = #tpu.pipeline_mode<synchronous>, transform_indices = @transform_3, window_bounds = array<i64: 32, 32>}, {pipeline_mode = #tpu.pipeline_mode<synchronous>, transform_indices = @transform_4, window_bounds = array<i64: 1, 32>}, {pipeline_mode = #tpu.pipeline_mode<synchronous>, transform_indices = @transform_5, window_bounds = array<i64: 32, 32>}, {pipeline_mode = #tpu.pipeline_mode<synchronous>, transform_indices = @transform_6, window_bounds = array<i64: 1, 32>}, {pipeline_mode = #tpu.pipeline_mode<synchronous>, transform_indices = @transform_7, window_bounds = array<i64: 1, 8>}, {transform_indices = @transform_8, window_bounds = array<i64: 8, 32>}]} {
    %c0 = arith.constant 0 : index
    %c0_0 = arith.constant 0 : index
    %c0_1 = arith.constant 0 : index
    %0 = vector.load %arg1[%c0, %c0_0, %c0_1] : memref<8x8x32xf32, #tpu.memory_space<vmem>>, vector<8x8x32xf32>
    %1 = vector.shape_cast %0 : vector<8x8x32xf32> to vector<64x32xf32>
    %c0_2 = arith.constant 0 : index
    %c0_3 = arith.constant 0 : index
    %2 = vector.load %arg2[%c0_2, %c0_3] : memref<32x32xf32, #tpu.memory_space<vmem>>, vector<32x32xf32>
    %cst = arith.constant dense<0.000000e+00> : vector<64x32xf32>
    %3 = tpu.matmul %1, %2, %cst {dimension_numbers = #tpu.dot_dimension_numbers<[1], [0], [0], [1], [0, 0, 1, 1], [], []>} : vector<64x32xf32>, vector<32x32xf32>, vector<64x32xf32> -> vector<64x32xf32>
    %c0_4 = arith.constant 0 : index
    %c0_5 = arith.constant 0 : index
    %4 = vector.load %arg3[%c0_4, %c0_5] : memref<1x32xf32, #tpu.memory_space<vmem>>, vector<1x32xf32>
    %5 = vector.broadcast %4 : vector<1x32xf32> to vector<64x32xf32>
    %6 = arith.addf %3, %5 : vector<64x32xf32>
    %c0_6 = arith.constant 0 : index
    %c0_7 = arith.constant 0 : index
    %7 = vector.load %arg4[%c0_6, %c0_7] : memref<32x32xf32, #tpu.memory_space<vmem>>, vector<32x32xf32>
    %cst_8 = arith.constant dense<0.000000e+00> : vector<64x32xf32>
    %8 = tpu.matmul %1, %7, %cst_8 {dimension_numbers = #tpu.dot_dimension_numbers<[1], [0], [0], [1], [0, 0, 1, 1], [], []>} : vector<64x32xf32>, vector<32x32xf32>, vector<64x32xf32> -> vector<64x32xf32>
    %c0_9 = arith.constant 0 : index
    %c0_10 = arith.constant 0 : index
    %9 = vector.load %arg5[%c0_9, %c0_10] : memref<1x32xf32, #tpu.memory_space<vmem>>, vector<1x32xf32>
    %10 = vector.broadcast %9 : vector<1x32xf32> to vector<64x32xf32>
    %11 = arith.addf %8, %10 : vector<64x32xf32>
    %c0_11 = arith.constant 0 : index
    %c0_12 = arith.constant 0 : index
    %12 = vector.load %arg6[%c0_11, %c0_12] : memref<32x32xf32, #tpu.memory_space<vmem>>, vector<32x32xf32>
    %cst_13 = arith.constant dense<0.000000e+00> : vector<64x32xf32>
    %13 = tpu.matmul %1, %12, %cst_13 {dimension_numbers = #tpu.dot_dimension_numbers<[1], [0], [0], [1], [0, 0, 1, 1], [], []>} : vector<64x32xf32>, vector<32x32xf32>, vector<64x32xf32> -> vector<64x32xf32>
    %c0_14 = arith.constant 0 : index
    %c0_15 = arith.constant 0 : index
    %14 = vector.load %arg7[%c0_14, %c0_15] : memref<1x32xf32, #tpu.memory_space<vmem>>, vector<1x32xf32>
    %15 = vector.broadcast %14 : vector<1x32xf32> to vector<64x32xf32>
    %16 = arith.addf %13, %15 : vector<64x32xf32>
    %17 = vector.shape_cast %6 : vector<64x32xf32> to vector<8x8x32xf32>
    %18 = vector.shape_cast %11 : vector<64x32xf32> to vector<8x8x32xf32>
    %19 = vector.shape_cast %16 : vector<64x32xf32> to vector<8x8x32xf32>
    "tpu.trace_start"() <{level = 10 : i32, message = "bld,bmd->blm"}> : () -> ()
    %cst_16 = arith.constant dense<0.000000e+00> : vector<8x8x8xf32>
    %20 = tpu.matmul %17, %18, %cst_16 {dimension_numbers = #tpu.dot_dimension_numbers<[2], [2], [1], [1], [0, 0, 0, 1, 1, 1], [0], [0]>} : vector<8x8x32xf32>, vector<8x8x32xf32>, vector<8x8x8xf32> -> vector<8x8x8xf32>
    "tpu.trace_stop"() : () -> ()
    %cst_17 = arith.constant 0.0220970865 : f32
    %21 = vector.broadcast %cst_17 : f32 to vector<8x8x8xf32>
    %22 = arith.mulf %20, %21 : vector<8x8x8xf32>
    %cst_18 = arith.constant dense<0xFF800000> : vector<8x8xf32>
    %23 = vector.multi_reduction <maximumf>, %22, %cst_18 [2] : vector<8x8x8xf32> to vector<8x8xf32>
    %24 = vector.shape_cast %23 : vector<8x8xf32> to vector<8x8x1xf32>
    %25 = vector.broadcast %24 : vector<8x8x1xf32> to vector<8x8x8xf32>
    %26 = arith.subf %22, %25 : vector<8x8x8xf32>
    %27 = math.exp %26 : vector<8x8x8xf32>
    %cst_19 = arith.constant dense<0.000000e+00> : vector<8x8xf32>
    %28 = vector.multi_reduction <add>, %27, %cst_19 [2] : vector<8x8x8xf32> to vector<8x8xf32>
    %29 = vector.shape_cast %28 : vector<8x8xf32> to vector<8x8x1xf32>
    %30 = tpu.reciprocal %29 {approx = true} : vector<8x8x1xf32> -> vector<8x8x1xf32>
    %31 = vector.broadcast %30 : vector<8x8x1xf32> to vector<8x8x8xf32>
    %32 = arith.mulf %27, %31 : vector<8x8x8xf32>
    %c0_20 = arith.constant 0 : index
    %c0_21 = arith.constant 0 : index
    %33 = vector.load %arg8[%c0_20, %c0_21] : memref<1x8xf32, #tpu.memory_space<vmem>>, vector<1x8xf32>
    %34 = vector.shape_cast %33 : vector<1x8xf32> to vector<1x1x8xf32>
    %35 = vector.shape_cast %34 : vector<1x1x8xf32> to vector<1x1x8xf32>
    %36 = vector.broadcast %35 : vector<1x1x8xf32> to vector<8x1x8xf32>
    "tpu.trace_start"() <{level = 10 : i32, message = "bql,blm->bqm"}> : () -> ()
    %cst_22 = arith.constant dense<0.000000e+00> : vector<8x1x8xf32>
    %37 = tpu.matmul %36, %32, %cst_22 {dimension_numbers = #tpu.dot_dimension_numbers<[2], [1], [1], [2], [0, 0, 0, 1, 1, 2], [0], [0]>} : vector<8x1x8xf32>, vector<8x8x8xf32>, vector<8x1x8xf32> -> vector<8x1x8xf32>
    "tpu.trace_stop"() : () -> ()
    "tpu.trace_start"() <{level = 10 : i32, message = "bqm,bmf->bqf"}> : () -> ()
    %cst_23 = arith.constant dense<0.000000e+00> : vector<8x1x32xf32>
    %38 = tpu.matmul %37, %19, %cst_23 {dimension_numbers = #tpu.dot_dimension_numbers<[2], [1], [1], [2], [0, 0, 0, 1, 1, 2], [0], [0]>} : vector<8x1x8xf32>, vector<8x8x32xf32>, vector<8x1x32xf32> -> vector<8x1x32xf32>
    "tpu.trace_stop"() : () -> ()
    %39 = vector.shape_cast %38 : vector<8x1x32xf32> to vector<8x32xf32>
    %c0_24 = arith.constant 0 : index
    %c0_25 = arith.constant 0 : index
    %40 = vector.load %arg9[%c0_24, %c0_25] : memref<8x32xf32, #tpu.memory_space<vmem>>, vector<8x32xf32>
    tpu.vector_store %arg9[%c0_24, %c0_25], %39 {strides = array<i32>} : memref<8x32xf32, #tpu.memory_space<vmem>>, vector<8x32xf32>,
    return
  }
  func.func @transform_0(%arg0: i32) -> (i32, i32, i32) {
    %c0_i32 = arith.constant 0 : i32
    %c0_i32_0 = arith.constant 0 : i32
    %c0_i32_1 = arith.constant 0 : i32
    return %arg0, %c0_i32, %c0_i32_0 : i32, i32, i32
  }
  func.func @transform_1(%arg0: i32) -> (i32, i32) {
    %c0_i32 = arith.constant 0 : i32
    %c0_i32_0 = arith.constant 0 : i32
    %c0_i32_1 = arith.constant 0 : i32
    return %c0_i32, %c0_i32_0 : i32, i32
  }
  func.func @transform_2(%arg0: i32) -> (i32, i32) {
    %c0_i32 = arith.constant 0 : i32
    %c0_i32_0 = arith.constant 0 : i32
    %c0_i32_1 = arith.constant 0 : i32
    return %c0_i32, %c0_i32_0 : i32, i32
  }
  func.func @transform_3(%arg0: i32) -> (i32, i32) {
    %c0_i32 = arith.constant 0 : i32
    %c0_i32_0 = arith.constant 0 : i32
    %c0_i32_1 = arith.constant 0 : i32
    return %c0_i32, %c0_i32_0 : i32, i32
  }
  func.func @transform_4(%arg0: i32) -> (i32, i32) {
    %c0_i32 = arith.constant 0 : i32
    %c0_i32_0 = arith.constant 0 : i32
    %c0_i32_1 = arith.constant 0 : i32
    return %c0_i32, %c0_i32_0 : i32, i32
  }
  func.func @transform_5(%arg0: i32) -> (i32, i32) {
    %c0_i32 = arith.constant 0 : i32
    %c0_i32_0 = arith.constant 0 : i32
    %c0_i32_1 = arith.constant 0 : i32
    return %c0_i32, %c0_i32_0 : i32, i32
  }
  func.func @transform_6(%arg0: i32) -> (i32, i32) {
    %c0_i32 = arith.constant 0 : i32
    %c0_i32_0 = arith.constant 0 : i32
    %c0_i32_1 = arith.constant 0 : i32
    return %c0_i32, %c0_i32_0 : i32, i32
  }
  func.func @transform_7(%arg0: i32) -> (i32, i32) {
    %c0_i32 = arith.constant 0 : i32
    %c0_i32_0 = arith.constant 0 : i32
    %c0_i32_1 = arith.constant 0 : i32
    return %c0_i32, %c0_i32_0 : i32, i32
  }
  func.func @transform_8(%arg0: i32) -> (i32, i32) {
    %c0_i32 = arith.constant 0 : i32
    %c0_i32_0 = arith.constant 0 : i32
    return %arg0, %c0_i32 : i32, i32
  }
}

</mosaic_0001>

<llo_original>
// kernel: soft_nsa_self_attention.1
$region0: #{soft_nsa_self_attention.1}
  #allocation0 [shape = 'u32[]', space=smem, size = 0x4, offset = 0x4, fixed_abs, tag = 'smem constant byte address 0x4 - core index']
  #allocation1 [shape = 'u32[144,128]{1,0:T(1,128)}', space=vmem, size = 0x12000, scoped, tag = 'internal scratch']
  %s0 = inlined_call_operand.vmem [shape: f32[16,8,32], index: 0, kind: input, shape index: {}]
  %s1 = inlined_call_operand.vmem [shape: f32[32,32], index: 1, kind: input, shape index: {}]
  %s2 = inlined_call_operand.vmem [shape: f32[1,32], index: 2, kind: input, shape index: {}]
  %s3 = inlined_call_operand.vmem [shape: f32[32,32], index: 3, kind: input, shape index: {}]
  %s4 = inlined_call_operand.vmem [shape: f32[1,32], index: 4, kind: input, shape index: {}]
  %s5 = inlined_call_operand.vmem [shape: f32[32,32], index: 5, kind: input, shape index: {}]
  %s6 = inlined_call_operand.vmem [shape: f32[1,32], index: 6, kind: input, shape index: {}]
  %s7 = inlined_call_operand.vmem [shape: f32[1,8], index: 7, kind: input, shape index: {}]
  %s8 = inlined_call_operand.hbm [shape: f32[16,32], index: 8, kind: output, shape index: {}]
  %s9 = sld [smem:[#allocation0]]
  $region65: #{soft_nsa_self_attention.1} parent=0
    _
  %s11 = ssub.s32 1, %s9
  %s12 = scalar_select 0, %s11, %s9
  $region1: #{soft_nsa_self_attention.1} parent=0
    #allocation2 [shape = 'u8[8192]{0}', space=vmem, size = 0x2000, scoped, tag = 'output window, operand 0']
    #allocation3 [shape = 's32[2]{0}', space=sflag, size = 0x8, scoped, tag = 'scoped memory for soft_nsa_self_attention.1']
    %13 = vsyncpa [#allocation3], 0
    %s14 = scalar_lea.sflag [#allocation3], 1
    %15 = vsyncpa %s14, 0
    loop: start=0, step=1, limit=4
    $region2: #{soft_nsa_self_attention.1} parent=1 // loop_pre_header
      _
    $region3: #{soft_nsa_self_attention.1} parent=1 // loop_header
      %s17 = sphi 0, %s21
      %p18 = scmp.ge.s32.totalorder %s17, 4
      %s27 = sphi 0, %s29
      %s30 = sphi 0, %s27
      %s31 = sphi 0, %s30
      %s47 = sphi 0, %s31
      %s51 = sphi 0, %s51
      %s53 = sphi 0, %s51
      %s54 = sphi 0, %s53
      %s68 = sphi 0, %s54
      %s72 = sphi 0, %s72
      %s74 = sphi 0, %s72
      %s75 = sphi 0, %s74
      %s89 = sphi 0, %s75
      %s93 = sphi 0, %s93
      %s95 = sphi 0, %s93
      %s96 = sphi 0, %s95
      %s110 = sphi 0, %s96
      %s114 = sphi 0, %s114
      %s116 = sphi 0, %s114
      %s117 = sphi 0, %s116
      %s131 = sphi 0, %s117
      %s135 = sphi 0, %s135
      %s137 = sphi 0, %s135
      %s138 = sphi 0, %s137
      %s152 = sphi 0, %s138
      %s156 = sphi 0, %s156
      %s158 = sphi 0, %s156
      %s159 = sphi 0, %s158
      %s173 = sphi 0, %s159
      %s177 = sphi 0, %s177
      %s179 = sphi 0, %s177
      %s180 = sphi 0, %s179
      %s194 = sphi 0, %s180
      %s200 = sphi 0, %s202
      %s203 = sphi 0, %s200
      %s204 = sphi 0, %s203
      %s220 = sphi 0, %s204
    $region4: #{soft_nsa_self_attention.1} parent=1 // loop_header_branch
      %20 = sbr.rel (%p18) target = $region8
    $region5: #{soft_nsa_self_attention.1} parent=1 // loop_body
      %s22 = ssub.s32 %s17, 1
      %s23 = ssub.s32 %s17, 2
      %s24 = sadd.s32 %s17, 1
      %s25 = ssub.s32 %s17, %s24
      %p26 = scmp.eq.s32.totalorder %s25, 0
      %s28 = sadd.s32 %s27, 1
      %s29 = scalar_select %p26, %s27, %s28
      %p32 = pneg %p26
      %p33 = scmp.eq.s32.totalorder %s17, 1
      %p34 = por %p32, %p33
      %p35 = scmp.ne.s32.totalorder %s27, %s30
      %p36 = scmp.eq.s32.totalorder %s17, 0
      %p37 = por %p35, %p36
      %p38 = scmp.ne.s32.totalorder %s27, %s30
      %p39 = scmp.eq.s32.totalorder %s22, 1
      %p40 = por %p38, %p39
      %p41 = scmp.ne.s32.totalorder %s30, %s31
      %p42 = scmp.eq.s32.totalorder %s22, 0
      %p43 = por %p41, %p42
      %p44 = scmp.ne.s32.totalorder %s30, %s31
      %p45 = scmp.eq.s32.totalorder %s23, 1
      %p46 = por %p44, %p45
      %p48 = scmp.ne.s32.totalorder %s31, %s47
      %p49 = scmp.eq.s32.totalorder %s23, 0
      %p50 = por %p48, %p49
      %s52 = sadd.s32 %s51, 1
      %p55 = scmp.eq.s32.totalorder %s17, 1
      %p56 = scmp.ne.s32.totalorder %s51, %s53
      %p57 = scmp.eq.s32.totalorder %s17, 0
      %p58 = por %p56, %p57
      %p59 = scmp.ne.s32.totalorder %s51, %s53
      %p60 = scmp.eq.s32.totalorder %s22, 1
      %p61 = por %p59, %p60
      %p62 = scmp.ne.s32.totalorder %s53, %s54
      %p63 = scmp.eq.s32.totalorder %s22, 0
      %p64 = por %p62, %p63
      %p65 = scmp.ne.s32.totalorder %s53, %s54
      %p66 = scmp.eq.s32.totalorder %s23, 1
      %p67 = por %p65, %p66
      %p69 = scmp.ne.s32.totalorder %s54, %s68
      %p70 = scmp.eq.s32.totalorder %s23, 0
      %p71 = por %p69, %p70
      %s73 = sadd.s32 %s72, 1
      %p76 = scmp.eq.s32.totalorder %s17, 1
      %p77 = scmp.ne.s32.totalorder %s72, %s74
      %p78 = scmp.eq.s32.totalorder %s17, 0
      %p79 = por %p77, %p78
      %p80 = scmp.ne.s32.totalorder %s72, %s74
      %p81 = scmp.eq.s32.totalorder %s22, 1
      %p82 = por %p80, %p81
      %p83 = scmp.ne.s32.totalorder %s74, %s75
      %p84 = scmp.eq.s32.totalorder %s22, 0
      %p85 = por %p83, %p84
      %p86 = scmp.ne.s32.totalorder %s74, %s75
      %p87 = scmp.eq.s32.totalorder %s23, 1
      %p88 = por %p86, %p87
      %p90 = scmp.ne.s32.totalorder %s75, %s89
      %p91 = scmp.eq.s32.totalorder %s23, 0
      %p92 = por %p90, %p91
      %s94 = sadd.s32 %s93, 1
      %p97 = scmp.eq.s32.totalorder %s17, 1
      %p98 = scmp.ne.s32.totalorder %s93, %s95
      %p99 = scmp.eq.s32.totalorder %s17, 0
      %p100 = por %p98, %p99
      %p101 = scmp.ne.s32.totalorder %s93, %s95
      %p102 = scmp.eq.s32.totalorder %s22, 1
      %p103 = por %p101, %p102
      %p104 = scmp.ne.s32.totalorder %s95, %s96
      %p105 = scmp.eq.s32.totalorder %s22, 0
      %p106 = por %p104, %p105
      %p107 = scmp.ne.s32.totalorder %s95, %s96
      %p108 = scmp.eq.s32.totalorder %s23, 1
      %p109 = por %p107, %p108
      %p111 = scmp.ne.s32.totalorder %s96, %s110
      %p112 = scmp.eq.s32.totalorder %s23, 0
      %p113 = por %p111, %p112
      %s115 = sadd.s32 %s114, 1
      %p118 = scmp.eq.s32.totalorder %s17, 1
      %p119 = scmp.ne.s32.totalorder %s114, %s116
      %p120 = scmp.eq.s32.totalorder %s17, 0
      %p121 = por %p119, %p120
      %p122 = scmp.ne.s32.totalorder %s114, %s116
      %p123 = scmp.eq.s32.totalorder %s22, 1
      %p124 = por %p122, %p123
      %p125 = scmp.ne.s32.totalorder %s116, %s117
      %p126 = scmp.eq.s32.totalorder %s22, 0
      %p127 = por %p125, %p126
      %p128 = scmp.ne.s32.totalorder %s116, %s117
      %p129 = scmp.eq.s32.totalorder %s23, 1
      %p130 = por %p128, %p129
      %p132 = scmp.ne.s32.totalorder %s117, %s131
      %p133 = scmp.eq.s32.totalorder %s23, 0
      %p134 = por %p132, %p133
      %s136 = sadd.s32 %s135, 1
      %p139 = scmp.eq.s32.totalorder %s17, 1
      %p140 = scmp.ne.s32.totalorder %s135, %s137
      %p141 = scmp.eq.s32.totalorder %s17, 0
      %p142 = por %p140, %p141
      %p143 = scmp.ne.s32.totalorder %s135, %s137
      %p144 = scmp.eq.s32.totalorder %s22, 1
      %p145 = por %p143, %p144
      %p146 = scmp.ne.s32.totalorder %s137, %s138
      %p147 = scmp.eq.s32.totalorder %s22, 0
      %p148 = por %p146, %p147
      %p149 = scmp.ne.s32.totalorder %s137, %s138
      %p150 = scmp.eq.s32.totalorder %s23, 1
      %p151 = por %p149, %p150
      %p153 = scmp.ne.s32.totalorder %s138, %s152
      %p154 = scmp.eq.s32.totalorder %s23, 0
      %p155 = por %p153, %p154
      %s157 = sadd.s32 %s156, 1
      %p160 = scmp.eq.s32.totalorder %s17, 1
      %p161 = scmp.ne.s32.totalorder %s156, %s158
      %p162 = scmp.eq.s32.totalorder %s17, 0
      %p163 = por %p161, %p162
      %p164 = scmp.ne.s32.totalorder %s156, %s158
      %p165 = scmp.eq.s32.totalorder %s22, 1
      %p166 = por %p164, %p165
      %p167 = scmp.ne.s32.totalorder %s158, %s159
      %p168 = scmp.eq.s32.totalorder %s22, 0
      %p169 = por %p167, %p168
      %p170 = scmp.ne.s32.totalorder %s158, %s159
      %p171 = scmp.eq.s32.totalorder %s23, 1
      %p172 = por %p170, %p171
      %p174 = scmp.ne.s32.totalorder %s159, %s173
      %p175 = scmp.eq.s32.totalorder %s23, 0
      %p176 = por %p174, %p175
      %s178 = sadd.s32 %s177, 1
      %p181 = scmp.eq.s32.totalorder %s17, 1
      %p182 = scmp.ne.s32.totalorder %s177, %s179
      %p183 = scmp.eq.s32.totalorder %s17, 0
      %p184 = por %p182, %p183
      %p185 = scmp.ne.s32.totalorder %s177, %s179
      %p186 = scmp.eq.s32.totalorder %s22, 1
      %p187 = por %p185, %p186
      %p188 = scmp.ne.s32.totalorder %s179, %s180
      %p189 = scmp.eq.s32.totalorder %s22, 0
      %p190 = por %p188, %p189
      %p191 = scmp.ne.s32.totalorder %s179, %s180
      %p192 = scmp.eq.s32.totalorder %s23, 1
      %p193 = por %p191, %p192
      %p195 = scmp.ne.s32.totalorder %s180, %s194
      %p196 = scmp.eq.s32.totalorder %s23, 0
      %p197 = por %p195, %p196
      %s198 = ssub.s32 %s17, %s24
      %p199 = scmp.eq.s32.totalorder %s198, 0
      %s201 = sadd.s32 %s200, 1
      %s202 = scalar_select %p199, %s200, %s201
      %p205 = pneg %p199
      %p206 = scmp.eq.s32.totalorder %s17, 1
      %p207 = por %p205, %p206
      %p208 = scmp.ne.s32.totalorder %s200, %s203
      %p209 = scmp.eq.s32.totalorder %s17, 0
      %p210 = por %p208, %p209
      %p211 = scmp.ne.s32.totalorder %s200, %s203
      %p212 = scmp.eq.s32.totalorder %s22, 1
      %p213 = por %p211, %p212
      %p214 = scmp.ne.s32.totalorder %s203, %s204
      %p215 = scmp.eq.s32.totalorder %s22, 0
      %p216 = por %p214, %p215
      %p217 = scmp.ne.s32.totalorder %s203, %s204
      %p218 = scmp.eq.s32.totalorder %s23, 1
      %p219 = por %p217, %p218
      %p221 = scmp.ne.s32.totalorder %s204, %s220
      %p222 = scmp.eq.s32.totalorder %s23, 0
      %p223 = por %p221, %p222
      %p224 = scmp.le.s32.totalorder 1, %s17
      %p225 = scmp.lt.s32.totalorder %s17, 3
      %p226 = pnand %p224, %p225
      %p227 = pneg %p226
      // Predicated region
      $region9: #{soft_nsa_self_attention.1} parent=5 // pred_check
        _
      $region10: #{soft_nsa_self_attention.1} parent=5 // pred_check_branch
        %229 = sbr.rel (%p226) target = $region12
      $region11: #{soft_nsa_self_attention.1} parent=5 // pred_region
        %s230 = ssub.s32 %s17, 1
        // Predicated region
        $region13: #{soft_nsa_self_attention.1} parent=11 // pred_check
          %p231 = pneg %p64
        $region14: #{soft_nsa_self_attention.1} parent=11 // pred_check_branch
          %233 = sbr.rel (%p231) target = $region16
        $region15: #{soft_nsa_self_attention.1} parent=11 // pred_region
          _
        $region16: #{soft_nsa_self_attention.1} parent=11 // pred_fallthru
          _
        // Predicated region
        $region17: #{soft_nsa_self_attention.1} parent=11 // pred_check
          %p234 = pneg %p85
        $region18: #{soft_nsa_self_attention.1} parent=11 // pred_check_branch
          %236 = sbr.rel (%p234) target = $region20
        $region19: #{soft_nsa_self_attention.1} parent=11 // pred_region
          _
        $region20: #{soft_nsa_self_attention.1} parent=11 // pred_fallthru
          _
        // Predicated region
        $region21: #{soft_nsa_self_attention.1} parent=11 // pred_check
          %p237 = pneg %p106
        $region22: #{soft_nsa_self_attention.1} parent=11 // pred_check_branch
          %239 = sbr.rel (%p237) target = $region24
        $region23: #{soft_nsa_self_attention.1} parent=11 // pred_region
          _
        $region24: #{soft_nsa_self_attention.1} parent=11 // pred_fallthru
          _
        // Predicated region
        $region25: #{soft_nsa_self_attention.1} parent=11 // pred_check
          %p240 = pneg %p127
        $region26: #{soft_nsa_self_attention.1} parent=11 // pred_check_branch
          %242 = sbr.rel (%p240) target = $region28
        $region27: #{soft_nsa_self_attention.1} parent=11 // pred_region
          _
        $region28: #{soft_nsa_self_attention.1} parent=11 // pred_fallthru
          _
        // Predicated region
        $region29: #{soft_nsa_self_attention.1} parent=11 // pred_check
          %p243 = pneg %p148
        $region30: #{soft_nsa_self_attention.1} parent=11 // pred_check_branch
          %245 = sbr.rel (%p243) target = $region32
        $region31: #{soft_nsa_self_attention.1} parent=11 // pred_region
          _
        $region32: #{soft_nsa_self_attention.1} parent=11 // pred_fallthru
          _
        // Predicated region
        $region33: #{soft_nsa_self_attention.1} parent=11 // pred_check
          %p246 = pneg %p169
        $region34: #{soft_nsa_self_attention.1} parent=11 // pred_check_branch
          %248 = sbr.rel (%p246) target = $region36
        $region35: #{soft_nsa_self_attention.1} parent=11 // pred_region
          _
        $region36: #{soft_nsa_self_attention.1} parent=11 // pred_fallthru
          _
        // Predicated region
        $region37: #{soft_nsa_self_attention.1} parent=11 // pred_check
          %p249 = pneg %p190
        $region38: #{soft_nsa_self_attention.1} parent=11 // pred_check_branch
          %251 = sbr.rel (%p249) target = $region40
        $region39: #{soft_nsa_self_attention.1} parent=11 // pred_region
          _
        $region40: #{soft_nsa_self_attention.1} parent=11 // pred_fallthru
          _
      $region12: #{soft_nsa_self_attention.1} parent=5 // pred_fallthru
        _
      %p252 = scmp.lt.s32.totalorder %s17, 2
      // Predicated region
      $region41: #{soft_nsa_self_attention.1} parent=5 // pred_check
        %p253 = pneg %p252
      $region42: #{soft_nsa_self_attention.1} parent=5 // pred_check_branch
        %255 = sbr.rel (%p253) target = $region44
      $region43: #{soft_nsa_self_attention.1} parent=5 // pred_region
        // Predicated region
        $region45: #{soft_nsa_self_attention.1} parent=43 // pred_check
          %p256 = pneg %p37
        $region46: #{soft_nsa_self_attention.1} parent=43 // pred_check_branch
          %258 = sbr.rel (%p256) target = $region48
        $region47: #{soft_nsa_self_attention.1} parent=43 // pred_region
          %s259 = smul.u32 8, %s17
          %p260 = scmp.lt.s32.totalorder %s259, 15
          %s261 = scalar_select %p260, %s259, 15
          %s262 = smul.addr %s261, 8
          %s263 = scalar_lea.vmem %s0, %s262
          %s264 = smul.u32 8, %s17
        $region48: #{soft_nsa_self_attention.1} parent=43 // pred_fallthru
          _
      $region44: #{soft_nsa_self_attention.1} parent=5 // pred_fallthru
        _
      %p265 = scmp.le.s32.totalorder 1, %s17
      %p266 = scmp.lt.s32.totalorder %s17, 3
      %p267 = pnand %p265, %p266
      %p268 = pneg %p267
      // Predicated region
      $region49: #{soft_nsa_self_attention.1} parent=5 // pred_check
        _
      $region50: #{soft_nsa_self_attention.1} parent=5 // pred_check_branch
        %270 = sbr.rel (%p267) target = $region52
      $region51: #{soft_nsa_self_attention.1} parent=5 // pred_region
        %s271 = ssub.s32 %s17, 1
        %s272 = smul.u32 8, %s22
        %p273 = scmp.lt.s32.totalorder %s272, 15
        %s274 = scalar_select %p273, %s272, 15
        %s275 = smul.addr %s274, 8
        %s276 = scalar_lea.vmem %s0, %s275
        %p277 = pneg %p43
        %p278 = pneg %p40
        %p279 = pneg %p64
        %p280 = pneg %p61
        %p281 = pneg %p85
        %p282 = pneg %p82
        %p283 = pneg %p106
        %p284 = pneg %p103
        %p285 = pneg %p127
        %p286 = pneg %p124
        %p287 = pneg %p148
        %p288 = pneg %p145
        %p289 = pneg %p169
        %p290 = pneg %p166
        %p291 = pneg %p190
        %p292 = pneg %p187
        %p293 = pneg %p216
        %p294 = pneg %p213
        %s295 = sand.u32 %s203, 1
        %s296 = scalar_lea.sflag [#allocation3], %s295
        %s297 = sand.u32 %s203, 1
        %s298 = smul.addr %s297, 8
        %s299 = scalar_lea.vmem [#allocation2], %s298
        %s300 = smul.u32 8, %s22
        %p301 = scmp.lt.s32.totalorder %s300, 15
        %s302 = scalar_select %p301, %s300, 15
        %s303 = smul.addr %s302, 8
        %s304 = scalar_lea.vmem %s0, %s303
        %s305 = smul.u32 8, %s22
        %v306 = vld [vmem:[%s304] sm:$0xff]
        %v307 = vld [vmem:[%s304 + $0x8] sm:$0xff]
        %v308 = vld [vmem:[%s304 + $0x10] sm:$0xff]
        %v309 = vld [vmem:[%s304 + $0x18] sm:$0xff]
        %v310 = vld [vmem:[%s304 + $0x20] sm:$0xff]
        %v311 = vld [vmem:[%s304 + $0x28] sm:$0xff]
        %v312 = vld [vmem:[%s304 + $0x30] sm:$0xff]
        %v313 = vld [vmem:[%s304 + $0x38] sm:$0xff]
        %v314 = vld [vmem:[%s1] sm:$0xff]
        %v315 = vld [vmem:[%s1 + $0x8] sm:$0xff]
        %v316 = vld [vmem:[%s1 + $0x10] sm:$0xff]
        %v317 = vld [vmem:[%s1 + $0x18] sm:$0xff]
        %v318 = vld [vmem:[%s2] sm:$0x1]
        %v320 = vlaneseq
        %v321 = vshrl.u32 %v320, 7
        %v322 = vsub.s32 0, %v321
        %v323 = vrot.slane %v318, %v322
        %vm325 = vcmask 261120
        %v327 = vsel %vm325, %v306, 0
        %v330 = vsel %vm325, %v307, 0
        %v333 = vsel %vm325, %v308, 0
        %v336 = vsel %vm325, %v309, 0
        %v339 = vsel %vm325, %v310, 0
        %v342 = vsel %vm325, %v311, 0
        %v345 = vsel %vm325, %v312, 0
        %v348 = vsel %vm325, %v313, 0
        %350 = vmatprep.subr.mxu0 0.0
        %351 = vmatpush1.msra.mxu0 %v314
        %352 = vmatprep.subr.mxu0 0.0
        %353 = vmatpush1.msra.mxu0 %v315
        %354 = vmatprep.subr.mxu0 0.0
        %355 = vmatpush1.msra.mxu0 %v316
        %356 = vmatprep.subr.mxu0 0.0
        %357 = vmatpush1.msra.mxu0 %v317
        %358 = vmatprep.subr.mxu0 0.0
        %359 = vmatpush1.msra.mxu0 0.0
        %360 = vmatprep.subr.mxu0 0.0
        %361 = vmatpush1.msra.mxu0 0.0
        %362 = vmatprep.subr.mxu0 0.0
        %363 = vmatpush1.msra.mxu0 0.0
        %364 = vmatprep.subr.mxu0 0.0
        %365 = vmatpush1.msra.mxu0 0.0
        %366 = vmatprep.subr.mxu0 0.0
        %367 = vmatpush1.msra.mxu0 0.0
        %368 = vmatprep.subr.mxu0 0.0
        %369 = vmatpush1.msra.mxu0 0.0
        %370 = vmatprep.subr.mxu0 0.0
        %371 = vmatpush1.msra.mxu0 0.0
        %372 = vmatprep.subr.mxu0 0.0
        %373 = vmatpush1.msra.mxu0 0.0
        %374 = vmatprep.subr.mxu0 0.0
        %375 = vmatpush1.msra.mxu0 0.0
        %376 = vmatprep.subr.mxu0 0.0
        %377 = vmatpush1.msra.mxu0 0.0
        %378 = vmatprep.subr.mxu0 0.0
        %379 = vmatpush1.msra.mxu0 0.0
        %380 = vmatprep.subr.mxu0 0.0
        %381 = vmatpush1.msra.mxu0 0.0
        %382 = vmatprep.subr.mxu0 0.0
        %383 = vmatpush1.msra.mxu0 0.0
        %384 = vmatprep.subr.mxu0 0.0
        %385 = vmatpush1.msra.mxu0 0.0
        %386 = vmatprep.subr.mxu0 0.0
        %387 = vmatpush1.msra.mxu0 0.0
        %388 = vmatprep.subr.mxu0 0.0
        %389 = vmatpush1.msra.mxu0 0.0
        %390 = vmatprep.subr.mxu0 0.0
        %391 = vmatpush1.msra.mxu0 0.0
        %392 = vmatprep.subr.mxu0 0.0
        %393 = vmatpush1.msra.mxu0 0.0
        %394 = vmatprep.subr.mxu0 0.0
        %395 = vmatpush1.msra.mxu0 0.0
        %396 = vmatprep.subr.mxu0 0.0
        %397 = vmatpush1.msra.mxu0 0.0
        %398 = vmatprep.subr.mxu0 0.0
        %399 = vmatpush1.msra.mxu0 0.0
        %400 = vmatprep.subr.mxu0 0.0
        %401 = vmatpush1.msra.mxu0 0.0
        %402 = vmatprep.subr.mxu0 0.0
        %403 = vmatpush1.msra.mxu0 0.0
        %404 = vmatprep.subr.mxu0 0.0
        %405 = vmatpush1.msra.mxu0 0.0
        %406 = vmatprep.subr.mxu0 0.0
        %407 = vmatpush1.msra.mxu0 0.0
        %408 = vmatprep.subr.mxu0 0.0
        %409 = vmatpush1.msra.mxu0 0.0
        %410 = vmatprep.subr.mxu0 0.0
        %411 = vmatpush1.msra.mxu0 0.0
        %412 = vmatprep.subr.mxu0 0.0
        %413 = vmatpush1.msra.mxu0 0.0
        %414 = vmatprep.mubr.f32.mxu0 0.0
        %415 = vmatmul.mubr.f32.gmra.mrb[0].mxu0 %v327
        %v416 = vpop.f32.mrb[0].mxu0
        %v417 = vadd.f32 %v323, %v416
        %v418 = vpop.f32.mrb[0].mxu0
        %419 = vmatprep.mubr.f32.mxu0 0.0
        %420 = vmatmul.mubr.f32.gmra.mrb[0].mxu0 %v330
        %v421 = vpop.f32.mrb[0].mxu0
        %v422 = vadd.f32 %v323, %v421
        %v423 = vpop.f32.mrb[0].mxu0
        %424 = vmatprep.mubr.f32.mxu0 0.0
        %425 = vmatmul.mubr.f32.gmra.mrb[0].mxu0 %v333
        %v426 = vpop.f32.mrb[0].mxu0
        %v427 = vadd.f32 %v323, %v426
        %v428 = vpop.f32.mrb[0].mxu0
        %429 = vmatprep.mubr.f32.mxu0 0.0
        %430 = vmatmul.mubr.f32.gmra.mrb[0].mxu0 %v336
        %v431 = vpop.f32.mrb[0].mxu0
        %v432 = vadd.f32 %v323, %v431
        %v433 = vpop.f32.mrb[0].mxu0
        %434 = vmatprep.mubr.f32.mxu0 0.0
        %435 = vmatmul.mubr.f32.gmra.mrb[0].mxu0 %v339
        %v436 = vpop.f32.mrb[0].mxu0
        %v437 = vadd.f32 %v323, %v436
        %v438 = vpop.f32.mrb[0].mxu0
        %439 = vmatprep.mubr.f32.mxu0 0.0
        %440 = vmatmul.mubr.f32.gmra.mrb[0].mxu0 %v342
        %v441 = vpop.f32.mrb[0].mxu0
        %v442 = vadd.f32 %v323, %v441
        %v443 = vpop.f32.mrb[0].mxu0
        %444 = vmatprep.mubr.f32.mxu0 0.0
        %445 = vmatmul.mubr.f32.gmra.mrb[0].mxu0 %v345
        %v446 = vpop.f32.mrb[0].mxu0
        %v447 = vadd.f32 %v323, %v446
        %v448 = vpop.f32.mrb[0].mxu0
        %449 = vmatprep.mubr.f32.mxu0 0.0
        %450 = vmatmul.mubr.f32.gmra.mrb[0].mxu0 %v348
        %v451 = vpop.f32.mrb[0].mxu0
        %v452 = vadd.f32 %v323, %v451
        %v453 = vpop.f32.mrb[0].mxu0
        %454 = vdwg.mxu0
        %v455 = vld [vmem:[%s3] sm:$0xff]
        %v456 = vld [vmem:[%s3 + $0x8] sm:$0xff]
        %v457 = vld [vmem:[%s3 + $0x10] sm:$0xff]
        %v458 = vld [vmem:[%s3 + $0x18] sm:$0xff]
        %v459 = vld [vmem:[%s4] sm:$0x1]
        %v461 = vlaneseq
        %v462 = vshrl.u32 %v461, 7
        %v463 = vsub.s32 0, %v462
        %v464 = vrot.slane %v459, %v463
        %466 = vmatprep.subr.mxu0 0.0
        %467 = vmatpush1.msra.mxu0 %v455
        %468 = vmatprep.subr.mxu0 0.0
        %469 = vmatpush1.msra.mxu0 %v456
        %470 = vmatprep.subr.mxu0 0.0
        %471 = vmatpush1.msra.mxu0 %v457
        %472 = vmatprep.subr.mxu0 0.0
        %473 = vmatpush1.msra.mxu0 %v458
        %474 = vmatprep.subr.mxu0 0.0
        %475 = vmatpush1.msra.mxu0 0.0
        %476 = vmatprep.subr.mxu0 0.0
        %477 = vmatpush1.msra.mxu0 0.0
        %478 = vmatprep.subr.mxu0 0.0
        %479 = vmatpush1.msra.mxu0 0.0
        %480 = vmatprep.subr.mxu0 0.0
        %481 = vmatpush1.msra.mxu0 0.0
        %482 = vmatprep.subr.mxu0 0.0
        %483 = vmatpush1.msra.mxu0 0.0
        %484 = vmatprep.subr.mxu0 0.0
        %485 = vmatpush1.msra.mxu0 0.0
        %486 = vmatprep.subr.mxu0 0.0
        %487 = vmatpush1.msra.mxu0 0.0
        %488 = vmatprep.subr.mxu0 0.0
        %489 = vmatpush1.msra.mxu0 0.0
        %490 = vmatprep.subr.mxu0 0.0
        %491 = vmatpush1.msra.mxu0 0.0
        %492 = vmatprep.subr.mxu0 0.0
        %493 = vmatpush1.msra.mxu0 0.0
        %494 = vmatprep.subr.mxu0 0.0
        %495 = vmatpush1.msra.mxu0 0.0
        %496 = vmatprep.subr.mxu0 0.0
        %497 = vmatpush1.msra.mxu0 0.0
        %498 = vmatprep.subr.mxu0 0.0
        %499 = vmatpush1.msra.mxu0 0.0
        %500 = vmatprep.subr.mxu0 0.0
        %501 = vmatpush1.msra.mxu0 0.0
        %502 = vmatprep.subr.mxu0 0.0
        %503 = vmatpush1.msra.mxu0 0.0
        %504 = vmatprep.subr.mxu0 0.0
        %505 = vmatpush1.msra.mxu0 0.0
        %506 = vmatprep.subr.mxu0 0.0
        %507 = vmatpush1.msra.mxu0 0.0
        %508 = vmatprep.subr.mxu0 0.0
        %509 = vmatpush1.msra.mxu0 0.0
        %510 = vmatprep.subr.mxu0 0.0
        %511 = vmatpush1.msra.mxu0 0.0
        %512 = vmatprep.subr.mxu0 0.0
        %513 = vmatpush1.msra.mxu0 0.0
        %514 = vmatprep.subr.mxu0 0.0
        %515 = vmatpush1.msra.mxu0 0.0
        %516 = vmatprep.subr.mxu0 0.0
        %517 = vmatpush1.msra.mxu0 0.0
        %518 = vmatprep.subr.mxu0 0.0
        %519 = vmatpush1.msra.mxu0 0.0
        %520 = vmatprep.subr.mxu0 0.0
        %521 = vmatpush1.msra.mxu0 0.0
        %522 = vmatprep.subr.mxu0 0.0
        %523 = vmatpush1.msra.mxu0 0.0
        %524 = vmatprep.subr.mxu0 0.0
        %525 = vmatpush1.msra.mxu0 0.0
        %526 = vmatprep.subr.mxu0 0.0
        %527 = vmatpush1.msra.mxu0 0.0
        %528 = vmatprep.subr.mxu0 0.0
        %529 = vmatpush1.msra.mxu0 0.0
        %530 = vmatprep.mubr.f32.mxu0 0.0
        %531 = vmatmul.mubr.f32.gmra.mrb[0].mxu0 %v327
        %v532 = vpop.f32.mrb[0].mxu0
        %v533 = vadd.f32 %v464, %v532
        %v534 = vpop.f32.mrb[0].mxu0
        %535 = vmatprep.mubr.f32.mxu0 0.0
        %536 = vmatmul.mubr.f32.gmra.mrb[0].mxu0 %v330
        %v537 = vpop.f32.mrb[0].mxu0
        %v538 = vadd.f32 %v464, %v537
        %v539 = vpop.f32.mrb[0].mxu0
        %540 = vmatprep.mubr.f32.mxu0 0.0
        %541 = vmatmul.mubr.f32.gmra.mrb[0].mxu0 %v333
        %v542 = vpop.f32.mrb[0].mxu0
        %v543 = vadd.f32 %v464, %v542
        %v544 = vpop.f32.mrb[0].mxu0
        %545 = vmatprep.mubr.f32.mxu0 0.0
        %546 = vmatmul.mubr.f32.gmra.mrb[0].mxu0 %v336
        %v547 = vpop.f32.mrb[0].mxu0
        %v548 = vadd.f32 %v464, %v547
        %v549 = vpop.f32.mrb[0].mxu0
        %550 = vmatprep.mubr.f32.mxu0 0.0
        %551 = vmatmul.mubr.f32.gmra.mrb[0].mxu0 %v339
        %v552 = vpop.f32.mrb[0].mxu0
        %v553 = vadd.f32 %v464, %v552
        %v554 = vpop.f32.mrb[0].mxu0
        %555 = vmatprep.mubr.f32.mxu0 0.0
        %556 = vmatmul.mubr.f32.gmra.mrb[0].mxu0 %v342
        %v557 = vpop.f32.mrb[0].mxu0
        %v558 = vadd.f32 %v464, %v557
        %v559 = vpop.f32.mrb[0].mxu0
        %560 = vmatprep.mubr.f32.mxu0 0.0
        %561 = vmatmul.mubr.f32.gmra.mrb[0].mxu0 %v345
        %v562 = vpop.f32.mrb[0].mxu0
        %v563 = vadd.f32 %v464, %v562
        %v564 = vpop.f32.mrb[0].mxu0
        %565 = vmatprep.mubr.f32.mxu0 0.0
        %566 = vmatmul.mubr.f32.gmra.mrb[0].mxu0 %v348
        %v567 = vpop.f32.mrb[0].mxu0
        %v568 = vadd.f32 %v464, %v567
        %v569 = vpop.f32.mrb[0].mxu0
        %570 = vdwg.mxu0
        %v571 = vld [vmem:[%s5] sm:$0xff]
        %v572 = vld [vmem:[%s5 + $0x8] sm:$0xff]
        %v573 = vld [vmem:[%s5 + $0x10] sm:$0xff]
        %v574 = vld [vmem:[%s5 + $0x18] sm:$0xff]
        %v575 = vld [vmem:[%s6] sm:$0x1]
        %v577 = vlaneseq
        %v578 = vshrl.u32 %v577, 7
        %v579 = vsub.s32 0, %v578
        %v580 = vrot.slane %v575, %v579
        %582 = vmatprep.subr.mxu0 0.0
        %583 = vmatpush1.msra.mxu0 %v571
        %584 = vmatprep.subr.mxu0 0.0
        %585 = vmatpush1.msra.mxu0 %v572
        %586 = vmatprep.subr.mxu0 0.0
        %587 = vmatpush1.msra.mxu0 %v573
        %588 = vmatprep.subr.mxu0 0.0
        %589 = vmatpush1.msra.mxu0 %v574
        %590 = vmatprep.subr.mxu0 0.0
        %591 = vmatpush1.msra.mxu0 0.0
        %592 = vmatprep.subr.mxu0 0.0
        %593 = vmatpush1.msra.mxu0 0.0
        %594 = vmatprep.subr.mxu0 0.0
        %595 = vmatpush1.msra.mxu0 0.0
        %596 = vmatprep.subr.mxu0 0.0
        %597 = vmatpush1.msra.mxu0 0.0
        %598 = vmatprep.subr.mxu0 0.0
        %599 = vmatpush1.msra.mxu0 0.0
        %600 = vmatprep.subr.mxu0 0.0
        %601 = vmatpush1.msra.mxu0 0.0
        %602 = vmatprep.subr.mxu0 0.0
        %603 = vmatpush1.msra.mxu0 0.0
        %604 = vmatprep.subr.mxu0 0.0
        %605 = vmatpush1.msra.mxu0 0.0
        %606 = vmatprep.subr.mxu0 0.0
        %607 = vmatpush1.msra.mxu0 0.0
        %608 = vmatprep.subr.mxu0 0.0
        %609 = vmatpush1.msra.mxu0 0.0
        %610 = vmatprep.subr.mxu0 0.0
        %611 = vmatpush1.msra.mxu0 0.0
        %612 = vmatprep.subr.mxu0 0.0
        %613 = vmatpush1.msra.mxu0 0.0
        %614 = vmatprep.subr.mxu0 0.0
        %615 = vmatpush1.msra.mxu0 0.0
        %616 = vmatprep.subr.mxu0 0.0
        %617 = vmatpush1.msra.mxu0 0.0
        %618 = vmatprep.subr.mxu0 0.0
        %619 = vmatpush1.msra.mxu0 0.0
        %620 = vmatprep.subr.mxu0 0.0
        %621 = vmatpush1.msra.mxu0 0.0
        %622 = vmatprep.subr.mxu0 0.0
        %623 = vmatpush1.msra.mxu0 0.0
        %624 = vmatprep.subr.mxu0 0.0
        %625 = vmatpush1.msra.mxu0 0.0
        %626 = vmatprep.subr.mxu0 0.0
        %627 = vmatpush1.msra.mxu0 0.0
        %628 = vmatprep.subr.mxu0 0.0
        %629 = vmatpush1.msra.mxu0 0.0
        %630 = vmatprep.subr.mxu0 0.0
        %631 = vmatpush1.msra.mxu0 0.0
        %632 = vmatprep.subr.mxu0 0.0
        %633 = vmatpush1.msra.mxu0 0.0
        %634 = vmatprep.subr.mxu0 0.0
        %635 = vmatpush1.msra.mxu0 0.0
        %636 = vmatprep.subr.mxu0 0.0
        %637 = vmatpush1.msra.mxu0 0.0
        %638 = vmatprep.subr.mxu0 0.0
        %639 = vmatpush1.msra.mxu0 0.0
        %640 = vmatprep.subr.mxu0 0.0
        %641 = vmatpush1.msra.mxu0 0.0
        %642 = vmatprep.subr.mxu0 0.0
        %643 = vmatpush1.msra.mxu0 0.0
        %644 = vmatprep.subr.mxu0 0.0
        %645 = vmatpush1.msra.mxu0 0.0
        %646 = vmatprep.mubr.f32.mxu0 0.0
        %647 = vmatmul.mubr.f32.gmra.mrb[0].mxu0 %v327
        %v648 = vpop.f32.mrb[0].mxu0
        %v649 = vadd.f32 %v580, %v648
        %v650 = vpop.f32.mrb[0].mxu0
        %651 = vmatprep.mubr.f32.mxu0 0.0
        %652 = vmatmul.mubr.f32.gmra.mrb[0].mxu0 %v330
        %v653 = vpop.f32.mrb[0].mxu0
        %v654 = vadd.f32 %v580, %v653
        %v655 = vpop.f32.mrb[0].mxu0
        %656 = vmatprep.mubr.f32.mxu0 0.0
        %657 = vmatmul.mubr.f32.gmra.mrb[0].mxu0 %v333
        %v658 = vpop.f32.mrb[0].mxu0
        %v659 = vadd.f32 %v580, %v658
        %v660 = vpop.f32.mrb[0].mxu0
        %661 = vmatprep.mubr.f32.mxu0 0.0
        %662 = vmatmul.mubr.f32.gmra.mrb[0].mxu0 %v336
        %v663 = vpop.f32.mrb[0].mxu0
        %v664 = vadd.f32 %v580, %v663
        %v665 = vpop.f32.mrb[0].mxu0
        %666 = vmatprep.mubr.f32.mxu0 0.0
        %667 = vmatmul.mubr.f32.gmra.mrb[0].mxu0 %v339
        %v668 = vpop.f32.mrb[0].mxu0
        %v669 = vadd.f32 %v580, %v668
        %v670 = vpop.f32.mrb[0].mxu0
        %671 = vmatprep.mubr.f32.mxu0 0.0
        %672 = vmatmul.mubr.f32.gmra.mrb[0].mxu0 %v342
        %v673 = vpop.f32.mrb[0].mxu0
        %v674 = vadd.f32 %v580, %v673
        %v675 = vpop.f32.mrb[0].mxu0
        %676 = vmatprep.mubr.f32.mxu0 0.0
        %677 = vmatmul.mubr.f32.gmra.mrb[0].mxu0 %v345
        %v678 = vpop.f32.mrb[0].mxu0
        %v679 = vadd.f32 %v580, %v678
        %v680 = vpop.f32.mrb[0].mxu0
        %681 = vmatprep.mubr.f32.mxu0 0.0
        %682 = vmatmul.mubr.f32.gmra.mrb[0].mxu0 %v348
        %v683 = vpop.f32.mrb[0].mxu0
        %v684 = vadd.f32 %v580, %v683
        %v685 = vpop.f32.mrb[0].mxu0
        %686 = vdwg.mxu0
        %v688 = vsel %vm325, %v417, 0
        %v691 = vsel %vm325, %v533, 0
        %693 = vmatprep.subr.mxu0 0.0
        %694 = vmatpush1.xpose.msra.mxu0 %v691
        %695 = vmatprep.subr.mxu0 0.0
        %696 = vmatpush1.xpose.msra.mxu0 0.0
        %697 = vmatprep.subr.mxu0 0.0
        %698 = vmatpush1.xpose.msra.mxu0 0.0
        %699 = vmatprep.subr.mxu0 0.0
        %700 = vmatpush1.xpose.msra.mxu0 0.0
        %701 = vmatprep.subr.mxu0 0.0
        %702 = vmatpush1.xpose.msra.mxu0 0.0
        %703 = vmatprep.subr.mxu0 0.0
        %704 = vmatpush1.xpose.msra.mxu0 0.0
        %705 = vmatprep.subr.mxu0 0.0
        %706 = vmatpush1.xpose.msra.mxu0 0.0
        %707 = vmatprep.subr.mxu0 0.0
        %708 = vmatpush1.xpose.msra.mxu0 0.0
        %709 = vmatprep.subr.mxu0 0.0
        %710 = vmatpush1.xpose.msra.mxu0 0.0
        %711 = vmatprep.subr.mxu0 0.0
        %712 = vmatpush1.xpose.msra.mxu0 0.0
        %713 = vmatprep.subr.mxu0 0.0
        %714 = vmatpush1.xpose.msra.mxu0 0.0
        %715 = vmatprep.subr.mxu0 0.0
        %716 = vmatpush1.xpose.msra.mxu0 0.0
        %717 = vmatprep.subr.mxu0 0.0
        %718 = vmatpush1.xpose.msra.mxu0 0.0
        %719 = vmatprep.subr.mxu0 0.0
        %720 = vmatpush1.xpose.msra.mxu0 0.0
        %721 = vmatprep.subr.mxu0 0.0
        %722 = vmatpush1.xpose.msra.mxu0 0.0
        %723 = vmatprep.subr.mxu0 0.0
        %724 = vmatpush1.xpose.msra.mxu0 0.0
        %725 = vmatprep.subr.mxu0 0.0
        %726 = vmatpush1.xpose.msra.mxu0 0.0
        %727 = vmatprep.subr.mxu0 0.0
        %728 = vmatpush1.xpose.msra.mxu0 0.0
        %729 = vmatprep.subr.mxu0 0.0
        %730 = vmatpush1.xpose.msra.mxu0 0.0
        %731 = vmatprep.subr.mxu0 0.0
        %732 = vmatpush1.xpose.msra.mxu0 0.0
        %733 = vmatprep.subr.mxu0 0.0
        %734 = vmatpush1.xpose.msra.mxu0 0.0
        %735 = vmatprep.subr.mxu0 0.0
        %736 = vmatpush1.xpose.msra.mxu0 0.0
        %737 = vmatprep.subr.mxu0 0.0
        %738 = vmatpush1.xpose.msra.mxu0 0.0
        %739 = vmatprep.subr.mxu0 0.0
        %740 = vmatpush1.xpose.msra.mxu0 0.0
        %741 = vmatprep.subr.mxu0 0.0
        %742 = vmatpush1.xpose.msra.mxu0 0.0
        %743 = vmatprep.subr.mxu0 0.0
        %744 = vmatpush1.xpose.msra.mxu0 0.0
        %745 = vmatprep.subr.mxu0 0.0
        %746 = vmatpush1.xpose.msra.mxu0 0.0
        %747 = vmatprep.subr.mxu0 0.0
        %748 = vmatpush1.xpose.msra.mxu0 0.0
        %749 = vmatprep.subr.mxu0 0.0
        %750 = vmatpush1.xpose.msra.mxu0 0.0
        %751 = vmatprep.subr.mxu0 0.0
        %752 = vmatpush1.xpose.msra.mxu0 0.0
        %753 = vmatprep.subr.mxu0 0.0
        %754 = vmatpush1.xpose.msra.mxu0 0.0
        %755 = vmatprep.subr.mxu0 0.0
        %756 = vmatpush1.xpose.msra.mxu0 0.0
        %757 = vmatprep.mubr.f32.mxu0 0.0
        %758 = vmatmul.mubr.f32.gmra.mrb[0].mxu0 %v688
        %v759 = vpop.f32.mrb[0].mxu0
        %v760 = vadd.f32 0.0, %v759
        %v761 = vpop.f32.mrb[0].mxu0
        %762 = vdwg.mxu0
        %v764 = vsel %vm325, %v422, 0
        %v767 = vsel %vm325, %v538, 0
        %769 = vmatprep.subr.mxu0 0.0
        %770 = vmatpush1.xpose.msra.mxu0 %v767
        %771 = vmatprep.subr.mxu0 0.0
        %772 = vmatpush1.xpose.msra.mxu0 0.0
        %773 = vmatprep.subr.mxu0 0.0
        %774 = vmatpush1.xpose.msra.mxu0 0.0
        %775 = vmatprep.subr.mxu0 0.0
        %776 = vmatpush1.xpose.msra.mxu0 0.0
        %777 = vmatprep.subr.mxu0 0.0
        %778 = vmatpush1.xpose.msra.mxu0 0.0
        %779 = vmatprep.subr.mxu0 0.0
        %780 = vmatpush1.xpose.msra.mxu0 0.0
        %781 = vmatprep.subr.mxu0 0.0
        %782 = vmatpush1.xpose.msra.mxu0 0.0
        %783 = vmatprep.subr.mxu0 0.0
        %784 = vmatpush1.xpose.msra.mxu0 0.0
        %785 = vmatprep.subr.mxu0 0.0
        %786 = vmatpush1.xpose.msra.mxu0 0.0
        %787 = vmatprep.subr.mxu0 0.0
        %788 = vmatpush1.xpose.msra.mxu0 0.0
        %789 = vmatprep.subr.mxu0 0.0
        %790 = vmatpush1.xpose.msra.mxu0 0.0
        %791 = vmatprep.subr.mxu0 0.0
        %792 = vmatpush1.xpose.msra.mxu0 0.0
        %793 = vmatprep.subr.mxu0 0.0
        %794 = vmatpush1.xpose.msra.mxu0 0.0
        %795 = vmatprep.subr.mxu0 0.0
        %796 = vmatpush1.xpose.msra.mxu0 0.0
        %797 = vmatprep.subr.mxu0 0.0
        %798 = vmatpush1.xpose.msra.mxu0 0.0
        %799 = vmatprep.subr.mxu0 0.0
        %800 = vmatpush1.xpose.msra.mxu0 0.0
        %801 = vmatprep.subr.mxu0 0.0
        %802 = vmatpush1.xpose.msra.mxu0 0.0
        %803 = vmatprep.subr.mxu0 0.0
        %804 = vmatpush1.xpose.msra.mxu0 0.0
        %805 = vmatprep.subr.mxu0 0.0
        %806 = vmatpush1.xpose.msra.mxu0 0.0
        %807 = vmatprep.subr.mxu0 0.0
        %808 = vmatpush1.xpose.msra.mxu0 0.0
        %809 = vmatprep.subr.mxu0 0.0
        %810 = vmatpush1.xpose.msra.mxu0 0.0
        %811 = vmatprep.subr.mxu0 0.0
        %812 = vmatpush1.xpose.msra.mxu0 0.0
        %813 = vmatprep.subr.mxu0 0.0
        %814 = vmatpush1.xpose.msra.mxu0 0.0
        %815 = vmatprep.subr.mxu0 0.0
        %816 = vmatpush1.xpose.msra.mxu0 0.0
        %817 = vmatprep.subr.mxu0 0.0
        %818 = vmatpush1.xpose.msra.mxu0 0.0
        %819 = vmatprep.subr.mxu0 0.0
        %820 = vmatpush1.xpose.msra.mxu0 0.0
        %821 = vmatprep.subr.mxu0 0.0
        %822 = vmatpush1.xpose.msra.mxu0 0.0
        %823 = vmatprep.subr.mxu0 0.0
        %824 = vmatpush1.xpose.msra.mxu0 0.0
        %825 = vmatprep.subr.mxu0 0.0
        %826 = vmatpush1.xpose.msra.mxu0 0.0
        %827 = vmatprep.subr.mxu0 0.0
        %828 = vmatpush1.xpose.msra.mxu0 0.0
        %829 = vmatprep.subr.mxu0 0.0
        %830 = vmatpush1.xpose.msra.mxu0 0.0
        %831 = vmatprep.subr.mxu0 0.0
        %832 = vmatpush1.xpose.msra.mxu0 0.0
        %833 = vmatprep.mubr.f32.mxu0 0.0
        %834 = vmatmul.mubr.f32.gmra.mrb[0].mxu0 %v764
        %v835 = vpop.f32.mrb[0].mxu0
        %v836 = vadd.f32 0.0, %v835
        %v837 = vpop.f32.mrb[0].mxu0
        %838 = vdwg.mxu0
        %v840 = vsel %vm325, %v427, 0
        %v843 = vsel %vm325, %v543, 0
        %845 = vmatprep.subr.mxu0 0.0
        %846 = vmatpush1.xpose.msra.mxu0 %v843
        %847 = vmatprep.subr.mxu0 0.0
        %848 = vmatpush1.xpose.msra.mxu0 0.0
        %849 = vmatprep.subr.mxu0 0.0
        %850 = vmatpush1.xpose.msra.mxu0 0.0
        %851 = vmatprep.subr.mxu0 0.0
        %852 = vmatpush1.xpose.msra.mxu0 0.0
        %853 = vmatprep.subr.mxu0 0.0
        %854 = vmatpush1.xpose.msra.mxu0 0.0
        %855 = vmatprep.subr.mxu0 0.0
        %856 = vmatpush1.xpose.msra.mxu0 0.0
        %857 = vmatprep.subr.mxu0 0.0
        %858 = vmatpush1.xpose.msra.mxu0 0.0
        %859 = vmatprep.subr.mxu0 0.0
        %860 = vmatpush1.xpose.msra.mxu0 0.0
        %861 = vmatprep.subr.mxu0 0.0
        %862 = vmatpush1.xpose.msra.mxu0 0.0
        %863 = vmatprep.subr.mxu0 0.0
        %864 = vmatpush1.xpose.msra.mxu0 0.0
        %865 = vmatprep.subr.mxu0 0.0
        %866 = vmatpush1.xpose.msra.mxu0 0.0
        %867 = vmatprep.subr.mxu0 0.0
        %868 = vmatpush1.xpose.msra.mxu0 0.0
        %869 = vmatprep.subr.mxu0 0.0
        %870 = vmatpush1.xpose.msra.mxu0 0.0
        %871 = vmatprep.subr.mxu0 0.0
        %872 = vmatpush1.xpose.msra.mxu0 0.0
        %873 = vmatprep.subr.mxu0 0.0
        %874 = vmatpush1.xpose.msra.mxu0 0.0
        %875 = vmatprep.subr.mxu0 0.0
        %876 = vmatpush1.xpose.msra.mxu0 0.0
        %877 = vmatprep.subr.mxu0 0.0
        %878 = vmatpush1.xpose.msra.mxu0 0.0
        %879 = vmatprep.subr.mxu0 0.0
        %880 = vmatpush1.xpose.msra.mxu0 0.0
        %881 = vmatprep.subr.mxu0 0.0
        %882 = vmatpush1.xpose.msra.mxu0 0.0
        %883 = vmatprep.subr.mxu0 0.0
        %884 = vmatpush1.xpose.msra.mxu0 0.0
        %885 = vmatprep.subr.mxu0 0.0
        %886 = vmatpush1.xpose.msra.mxu0 0.0
        %887 = vmatprep.subr.mxu0 0.0
        %888 = vmatpush1.xpose.msra.mxu0 0.0
        %889 = vmatprep.subr.mxu0 0.0
        %890 = vmatpush1.xpose.msra.mxu0 0.0
        %891 = vmatprep.subr.mxu0 0.0
        %892 = vmatpush1.xpose.msra.mxu0 0.0
        %893 = vmatprep.subr.mxu0 0.0
        %894 = vmatpush1.xpose.msra.mxu0 0.0
        %895 = vmatprep.subr.mxu0 0.0
        %896 = vmatpush1.xpose.msra.mxu0 0.0
        %897 = vmatprep.subr.mxu0 0.0
        %898 = vmatpush1.xpose.msra.mxu0 0.0
        %899 = vmatprep.subr.mxu0 0.0
        %900 = vmatpush1.xpose.msra.mxu0 0.0
        %901 = vmatprep.subr.mxu0 0.0
        %902 = vmatpush1.xpose.msra.mxu0 0.0
        %903 = vmatprep.subr.mxu0 0.0
        %904 = vmatpush1.xpose.msra.mxu0 0.0
        %905 = vmatprep.subr.mxu0 0.0
        %906 = vmatpush1.xpose.msra.mxu0 0.0
        %907 = vmatprep.subr.mxu0 0.0
        %908 = vmatpush1.xpose.msra.mxu0 0.0
        %909 = vmatprep.mubr.f32.mxu0 0.0
        %910 = vmatmul.mubr.f32.gmra.mrb[0].mxu0 %v840
        %v911 = vpop.f32.mrb[0].mxu0
        %v912 = vadd.f32 0.0, %v911
        %v913 = vpop.f32.mrb[0].mxu0
        %914 = vdwg.mxu0
        %v916 = vsel %vm325, %v432, 0
        %v919 = vsel %vm325, %v548, 0
        %921 = vmatprep.subr.mxu0 0.0
        %922 = vmatpush1.xpose.msra.mxu0 %v919
        %923 = vmatprep.subr.mxu0 0.0
        %924 = vmatpush1.xpose.msra.mxu0 0.0
        %925 = vmatprep.subr.mxu0 0.0
        %926 = vmatpush1.xpose.msra.mxu0 0.0
        %927 = vmatprep.subr.mxu0 0.0
        %928 = vmatpush1.xpose.msra.mxu0 0.0
        %929 = vmatprep.subr.mxu0 0.0
        %930 = vmatpush1.xpose.msra.mxu0 0.0
        %931 = vmatprep.subr.mxu0 0.0
        %932 = vmatpush1.xpose.msra.mxu0 0.0
        %933 = vmatprep.subr.mxu0 0.0
        %934 = vmatpush1.xpose.msra.mxu0 0.0
        %935 = vmatprep.subr.mxu0 0.0
        %936 = vmatpush1.xpose.msra.mxu0 0.0
        %937 = vmatprep.subr.mxu0 0.0
        %938 = vmatpush1.xpose.msra.mxu0 0.0
        %939 = vmatprep.subr.mxu0 0.0
        %940 = vmatpush1.xpose.msra.mxu0 0.0
        %941 = vmatprep.subr.mxu0 0.0
        %942 = vmatpush1.xpose.msra.mxu0 0.0
        %943 = vmatprep.subr.mxu0 0.0
        %944 = vmatpush1.xpose.msra.mxu0 0.0
        %945 = vmatprep.subr.mxu0 0.0
        %946 = vmatpush1.xpose.msra.mxu0 0.0
        %947 = vmatprep.subr.mxu0 0.0
        %948 = vmatpush1.xpose.msra.mxu0 0.0
        %949 = vmatprep.subr.mxu0 0.0
        %950 = vmatpush1.xpose.msra.mxu0 0.0
        %951 = vmatprep.subr.mxu0 0.0
        %952 = vmatpush1.xpose.msra.mxu0 0.0
        %953 = vmatprep.subr.mxu0 0.0
        %954 = vmatpush1.xpose.msra.mxu0 0.0
        %955 = vmatprep.subr.mxu0 0.0
        %956 = vmatpush1.xpose.msra.mxu0 0.0
        %957 = vmatprep.subr.mxu0 0.0
        %958 = vmatpush1.xpose.msra.mxu0 0.0
        %959 = vmatprep.subr.mxu0 0.0
        %960 = vmatpush1.xpose.msra.mxu0 0.0
        %961 = vmatprep.subr.mxu0 0.0
        %962 = vmatpush1.xpose.msra.mxu0 0.0
        %963 = vmatprep.subr.mxu0 0.0
        %964 = vmatpush1.xpose.msra.mxu0 0.0
        %965 = vmatprep.subr.mxu0 0.0
        %966 = vmatpush1.xpose.msra.mxu0 0.0
        %967 = vmatprep.subr.mxu0 0.0
        %968 = vmatpush1.xpose.msra.mxu0 0.0
        %969 = vmatprep.subr.mxu0 0.0
        %970 = vmatpush1.xpose.msra.mxu0 0.0
        %971 = vmatprep.subr.mxu0 0.0
        %972 = vmatpush1.xpose.msra.mxu0 0.0
        %973 = vmatprep.subr.mxu0 0.0
        %974 = vmatpush1.xpose.msra.mxu0 0.0
        %975 = vmatprep.subr.mxu0 0.0
        %976 = vmatpush1.xpose.msra.mxu0 0.0
        %977 = vmatprep.subr.mxu0 0.0
        %978 = vmatpush1.xpose.msra.mxu0 0.0
        %979 = vmatprep.subr.mxu0 0.0
        %980 = vmatpush1.xpose.msra.mxu0 0.0
        %981 = vmatprep.subr.mxu0 0.0
        %982 = vmatpush1.xpose.msra.mxu0 0.0
        %983 = vmatprep.subr.mxu0 0.0
        %984 = vmatpush1.xpose.msra.mxu0 0.0
        %985 = vmatprep.mubr.f32.mxu0 0.0
        %986 = vmatmul.mubr.f32.gmra.mrb[0].mxu0 %v916
        %v987 = vpop.f32.mrb[0].mxu0
        %v988 = vadd.f32 0.0, %v987
        %v989 = vpop.f32.mrb[0].mxu0
        %990 = vdwg.mxu0
        %v992 = vsel %vm325, %v437, 0
        %v995 = vsel %vm325, %v553, 0
        %997 = vmatprep.subr.mxu0 0.0
        %998 = vmatpush1.xpose.msra.mxu0 %v995
        %999 = vmatprep.subr.mxu0 0.0
        %1000 = vmatpush1.xpose.msra.mxu0 0.0
        %1001 = vmatprep.subr.mxu0 0.0
        %1002 = vmatpush1.xpose.msra.mxu0 0.0
        %1003 = vmatprep.subr.mxu0 0.0
        %1004 = vmatpush1.xpose.msra.mxu0 0.0
        %1005 = vmatprep.subr.mxu0 0.0
        %1006 = vmatpush1.xpose.msra.mxu0 0.0
        %1007 = vmatprep.subr.mxu0 0.0
        %1008 = vmatpush1.xpose.msra.mxu0 0.0
        %1009 = vmatprep.subr.mxu0 0.0
        %1010 = vmatpush1.xpose.msra.mxu0 0.0
        %1011 = vmatprep.subr.mxu0 0.0
        %1012 = vmatpush1.xpose.msra.mxu0 0.0
        %1013 = vmatprep.subr.mxu0 0.0
        %1014 = vmatpush1.xpose.msra.mxu0 0.0
        %1015 = vmatprep.subr.mxu0 0.0
        %1016 = vmatpush1.xpose.msra.mxu0 0.0
        %1017 = vmatprep.subr.mxu0 0.0
        %1018 = vmatpush1.xpose.msra.mxu0 0.0
        %1019 = vmatprep.subr.mxu0 0.0
        %1020 = vmatpush1.xpose.msra.mxu0 0.0
        %1021 = vmatprep.subr.mxu0 0.0
        %1022 = vmatpush1.xpose.msra.mxu0 0.0
        %1023 = vmatprep.subr.mxu0 0.0
        %1024 = vmatpush1.xpose.msra.mxu0 0.0
        %1025 = vmatprep.subr.mxu0 0.0
        %1026 = vmatpush1.xpose.msra.mxu0 0.0
        %1027 = vmatprep.subr.mxu0 0.0
        %1028 = vmatpush1.xpose.msra.mxu0 0.0
        %1029 = vmatprep.subr.mxu0 0.0
        %1030 = vmatpush1.xpose.msra.mxu0 0.0
        %1031 = vmatprep.subr.mxu0 0.0
        %1032 = vmatpush1.xpose.msra.mxu0 0.0
        %1033 = vmatprep.subr.mxu0 0.0
        %1034 = vmatpush1.xpose.msra.mxu0 0.0
        %1035 = vmatprep.subr.mxu0 0.0
        %1036 = vmatpush1.xpose.msra.mxu0 0.0
        %1037 = vmatprep.subr.mxu0 0.0
        %1038 = vmatpush1.xpose.msra.mxu0 0.0
        %1039 = vmatprep.subr.mxu0 0.0
        %1040 = vmatpush1.xpose.msra.mxu0 0.0
        %1041 = vmatprep.subr.mxu0 0.0
        %1042 = vmatpush1.xpose.msra.mxu0 0.0
        %1043 = vmatprep.subr.mxu0 0.0
        %1044 = vmatpush1.xpose.msra.mxu0 0.0
        %1045 = vmatprep.subr.mxu0 0.0
        %1046 = vmatpush1.xpose.msra.mxu0 0.0
        %1047 = vmatprep.subr.mxu0 0.0
        %1048 = vmatpush1.xpose.msra.mxu0 0.0
        %1049 = vmatprep.subr.mxu0 0.0
        %1050 = vmatpush1.xpose.msra.mxu0 0.0
        %1051 = vmatprep.subr.mxu0 0.0
        %1052 = vmatpush1.xpose.msra.mxu0 0.0
        %1053 = vmatprep.subr.mxu0 0.0
        %1054 = vmatpush1.xpose.msra.mxu0 0.0
        %1055 = vmatprep.subr.mxu0 0.0
        %1056 = vmatpush1.xpose.msra.mxu0 0.0
        %1057 = vmatprep.subr.mxu0 0.0
        %1058 = vmatpush1.xpose.msra.mxu0 0.0
        %1059 = vmatprep.subr.mxu0 0.0
        %1060 = vmatpush1.xpose.msra.mxu0 0.0
        %1061 = vmatprep.mubr.f32.mxu0 0.0
        %1062 = vmatmul.mubr.f32.gmra.mrb[0].mxu0 %v992
        %v1063 = vpop.f32.mrb[0].mxu0
        %v1064 = vadd.f32 0.0, %v1063
        %v1065 = vpop.f32.mrb[0].mxu0
        %1066 = vdwg.mxu0
        %v1068 = vsel %vm325, %v442, 0
        %v1071 = vsel %vm325, %v558, 0
        %1073 = vmatprep.subr.mxu0 0.0
        %1074 = vmatpush1.xpose.msra.mxu0 %v1071
        %1075 = vmatprep.subr.mxu0 0.0
        %1076 = vmatpush1.xpose.msra.mxu0 0.0
        %1077 = vmatprep.subr.mxu0 0.0
        %1078 = vmatpush1.xpose.msra.mxu0 0.0
        %1079 = vmatprep.subr.mxu0 0.0
        %1080 = vmatpush1.xpose.msra.mxu0 0.0
        %1081 = vmatprep.subr.mxu0 0.0
        %1082 = vmatpush1.xpose.msra.mxu0 0.0
        %1083 = vmatprep.subr.mxu0 0.0
        %1084 = vmatpush1.xpose.msra.mxu0 0.0
        %1085 = vmatprep.subr.mxu0 0.0
        %1086 = vmatpush1.xpose.msra.mxu0 0.0
        %1087 = vmatprep.subr.mxu0 0.0
        %1088 = vmatpush1.xpose.msra.mxu0 0.0
        %1089 = vmatprep.subr.mxu0 0.0
        %1090 = vmatpush1.xpose.msra.mxu0 0.0
        %1091 = vmatprep.subr.mxu0 0.0
        %1092 = vmatpush1.xpose.msra.mxu0 0.0
        %1093 = vmatprep.subr.mxu0 0.0
        %1094 = vmatpush1.xpose.msra.mxu0 0.0
        %1095 = vmatprep.subr.mxu0 0.0
        %1096 = vmatpush1.xpose.msra.mxu0 0.0
        %1097 = vmatprep.subr.mxu0 0.0
        %1098 = vmatpush1.xpose.msra.mxu0 0.0
        %1099 = vmatprep.subr.mxu0 0.0
        %1100 = vmatpush1.xpose.msra.mxu0 0.0
        %1101 = vmatprep.subr.mxu0 0.0
        %1102 = vmatpush1.xpose.msra.mxu0 0.0
        %1103 = vmatprep.subr.mxu0 0.0
        %1104 = vmatpush1.xpose.msra.mxu0 0.0
        %1105 = vmatprep.subr.mxu0 0.0
        %1106 = vmatpush1.xpose.msra.mxu0 0.0
        %1107 = vmatprep.subr.mxu0 0.0
        %1108 = vmatpush1.xpose.msra.mxu0 0.0
        %1109 = vmatprep.subr.mxu0 0.0
        %1110 = vmatpush1.xpose.msra.mxu0 0.0
        %1111 = vmatprep.subr.mxu0 0.0
        %1112 = vmatpush1.xpose.msra.mxu0 0.0
        %1113 = vmatprep.subr.mxu0 0.0
        %1114 = vmatpush1.xpose.msra.mxu0 0.0
        %1115 = vmatprep.subr.mxu0 0.0
        %1116 = vmatpush1.xpose.msra.mxu0 0.0
        %1117 = vmatprep.subr.mxu0 0.0
        %1118 = vmatpush1.xpose.msra.mxu0 0.0
        %1119 = vmatprep.subr.mxu0 0.0
        %1120 = vmatpush1.xpose.msra.mxu0 0.0
        %1121 = vmatprep.subr.mxu0 0.0
        %1122 = vmatpush1.xpose.msra.mxu0 0.0
        %1123 = vmatprep.subr.mxu0 0.0
        %1124 = vmatpush1.xpose.msra.mxu0 0.0
        %1125 = vmatprep.subr.mxu0 0.0
        %1126 = vmatpush1.xpose.msra.mxu0 0.0
        %1127 = vmatprep.subr.mxu0 0.0
        %1128 = vmatpush1.xpose.msra.mxu0 0.0
        %1129 = vmatprep.subr.mxu0 0.0
        %1130 = vmatpush1.xpose.msra.mxu0 0.0
        %1131 = vmatprep.subr.mxu0 0.0
        %1132 = vmatpush1.xpose.msra.mxu0 0.0
        %1133 = vmatprep.subr.mxu0 0.0
        %1134 = vmatpush1.xpose.msra.mxu0 0.0
        %1135 = vmatprep.subr.mxu0 0.0
        %1136 = vmatpush1.xpose.msra.mxu0 0.0
        %1137 = vmatprep.mubr.f32.mxu0 0.0
        %1138 = vmatmul.mubr.f32.gmra.mrb[0].mxu0 %v1068
        %v1139 = vpop.f32.mrb[0].mxu0
        %v1140 = vadd.f32 0.0, %v1139
        %v1141 = vpop.f32.mrb[0].mxu0
        %1142 = vdwg.mxu0
        %v1144 = vsel %vm325, %v447, 0
        %v1147 = vsel %vm325, %v563, 0
        %1149 = vmatprep.subr.mxu0 0.0
        %1150 = vmatpush1.xpose.msra.mxu0 %v1147
        %1151 = vmatprep.subr.mxu0 0.0
        %1152 = vmatpush1.xpose.msra.mxu0 0.0
        %1153 = vmatprep.subr.mxu0 0.0
        %1154 = vmatpush1.xpose.msra.mxu0 0.0
        %1155 = vmatprep.subr.mxu0 0.0
        %1156 = vmatpush1.xpose.msra.mxu0 0.0
        %1157 = vmatprep.subr.mxu0 0.0
        %1158 = vmatpush1.xpose.msra.mxu0 0.0
        %1159 = vmatprep.subr.mxu0 0.0
        %1160 = vmatpush1.xpose.msra.mxu0 0.0
        %1161 = vmatprep.subr.mxu0 0.0
        %1162 = vmatpush1.xpose.msra.mxu0 0.0
        %1163 = vmatprep.subr.mxu0 0.0
        %1164 = vmatpush1.xpose.msra.mxu0 0.0
        %1165 = vmatprep.subr.mxu0 0.0
        %1166 = vmatpush1.xpose.msra.mxu0 0.0
        %1167 = vmatprep.subr.mxu0 0.0
        %1168 = vmatpush1.xpose.msra.mxu0 0.0
        %1169 = vmatprep.subr.mxu0 0.0
        %1170 = vmatpush1.xpose.msra.mxu0 0.0
        %1171 = vmatprep.subr.mxu0 0.0
        %1172 = vmatpush1.xpose.msra.mxu0 0.0
        %1173 = vmatprep.subr.mxu0 0.0
        %1174 = vmatpush1.xpose.msra.mxu0 0.0
        %1175 = vmatprep.subr.mxu0 0.0
        %1176 = vmatpush1.xpose.msra.mxu0 0.0
        %1177 = vmatprep.subr.mxu0 0.0
        %1178 = vmatpush1.xpose.msra.mxu0 0.0
        %1179 = vmatprep.subr.mxu0 0.0
        %1180 = vmatpush1.xpose.msra.mxu0 0.0
        %1181 = vmatprep.subr.mxu0 0.0
        %1182 = vmatpush1.xpose.msra.mxu0 0.0
        %1183 = vmatprep.subr.mxu0 0.0
        %1184 = vmatpush1.xpose.msra.mxu0 0.0
        %1185 = vmatprep.subr.mxu0 0.0
        %1186 = vmatpush1.xpose.msra.mxu0 0.0
        %1187 = vmatprep.subr.mxu0 0.0
        %1188 = vmatpush1.xpose.msra.mxu0 0.0
        %1189 = vmatprep.subr.mxu0 0.0
        %1190 = vmatpush1.xpose.msra.mxu0 0.0
        %1191 = vmatprep.subr.mxu0 0.0
        %1192 = vmatpush1.xpose.msra.mxu0 0.0
        %1193 = vmatprep.subr.mxu0 0.0
        %1194 = vmatpush1.xpose.msra.mxu0 0.0
        %1195 = vmatprep.subr.mxu0 0.0
        %1196 = vmatpush1.xpose.msra.mxu0 0.0
        %1197 = vmatprep.subr.mxu0 0.0
        %1198 = vmatpush1.xpose.msra.mxu0 0.0
        %1199 = vmatprep.subr.mxu0 0.0
        %1200 = vmatpush1.xpose.msra.mxu0 0.0
        %1201 = vmatprep.subr.mxu0 0.0
        %1202 = vmatpush1.xpose.msra.mxu0 0.0
        %1203 = vmatprep.subr.mxu0 0.0
        %1204 = vmatpush1.xpose.msra.mxu0 0.0
        %1205 = vmatprep.subr.mxu0 0.0
        %1206 = vmatpush1.xpose.msra.mxu0 0.0
        %1207 = vmatprep.subr.mxu0 0.0
        %1208 = vmatpush1.xpose.msra.mxu0 0.0
        %1209 = vmatprep.subr.mxu0 0.0
        %1210 = vmatpush1.xpose.msra.mxu0 0.0
        %1211 = vmatprep.subr.mxu0 0.0
        %1212 = vmatpush1.xpose.msra.mxu0 0.0
        %1213 = vmatprep.mubr.f32.mxu0 0.0
        %1214 = vmatmul.mubr.f32.gmra.mrb[0].mxu0 %v1144
        %v1215 = vpop.f32.mrb[0].mxu0
        %v1216 = vadd.f32 0.0, %v1215
        %v1217 = vpop.f32.mrb[0].mxu0
        %1218 = vdwg.mxu0
        %v1220 = vsel %vm325, %v452, 0
        %v1223 = vsel %vm325, %v568, 0
        %1225 = vmatprep.subr.mxu0 0.0
        %1226 = vmatpush1.xpose.msra.mxu0 %v1223
        %1227 = vmatprep.subr.mxu0 0.0
        %1228 = vmatpush1.xpose.msra.mxu0 0.0
        %1229 = vmatprep.subr.mxu0 0.0
        %1230 = vmatpush1.xpose.msra.mxu0 0.0
        %1231 = vmatprep.subr.mxu0 0.0
        %1232 = vmatpush1.xpose.msra.mxu0 0.0
        %1233 = vmatprep.subr.mxu0 0.0
        %1234 = vmatpush1.xpose.msra.mxu0 0.0
        %1235 = vmatprep.subr.mxu0 0.0
        %1236 = vmatpush1.xpose.msra.mxu0 0.0
        %1237 = vmatprep.subr.mxu0 0.0
        %1238 = vmatpush1.xpose.msra.mxu0 0.0
        %1239 = vmatprep.subr.mxu0 0.0
        %1240 = vmatpush1.xpose.msra.mxu0 0.0
        %1241 = vmatprep.subr.mxu0 0.0
        %1242 = vmatpush1.xpose.msra.mxu0 0.0
        %1243 = vmatprep.subr.mxu0 0.0
        %1244 = vmatpush1.xpose.msra.mxu0 0.0
        %1245 = vmatprep.subr.mxu0 0.0
        %1246 = vmatpush1.xpose.msra.mxu0 0.0
        %1247 = vmatprep.subr.mxu0 0.0
        %1248 = vmatpush1.xpose.msra.mxu0 0.0
        %1249 = vmatprep.subr.mxu0 0.0
        %1250 = vmatpush1.xpose.msra.mxu0 0.0
        %1251 = vmatprep.subr.mxu0 0.0
        %1252 = vmatpush1.xpose.msra.mxu0 0.0
        %1253 = vmatprep.subr.mxu0 0.0
        %1254 = vmatpush1.xpose.msra.mxu0 0.0
        %1255 = vmatprep.subr.mxu0 0.0
        %1256 = vmatpush1.xpose.msra.mxu0 0.0
        %1257 = vmatprep.subr.mxu0 0.0
        %1258 = vmatpush1.xpose.msra.mxu0 0.0
        %1259 = vmatprep.subr.mxu0 0.0
        %1260 = vmatpush1.xpose.msra.mxu0 0.0
        %1261 = vmatprep.subr.mxu0 0.0
        %1262 = vmatpush1.xpose.msra.mxu0 0.0
        %1263 = vmatprep.subr.mxu0 0.0
        %1264 = vmatpush1.xpose.msra.mxu0 0.0
        %1265 = vmatprep.subr.mxu0 0.0
        %1266 = vmatpush1.xpose.msra.mxu0 0.0
        %1267 = vmatprep.subr.mxu0 0.0
        %1268 = vmatpush1.xpose.msra.mxu0 0.0
        %1269 = vmatprep.subr.mxu0 0.0
        %1270 = vmatpush1.xpose.msra.mxu0 0.0
        %1271 = vmatprep.subr.mxu0 0.0
        %1272 = vmatpush1.xpose.msra.mxu0 0.0
        %1273 = vmatprep.subr.mxu0 0.0
        %1274 = vmatpush1.xpose.msra.mxu0 0.0
        %1275 = vmatprep.subr.mxu0 0.0
        %1276 = vmatpush1.xpose.msra.mxu0 0.0
        %1277 = vmatprep.subr.mxu0 0.0
        %1278 = vmatpush1.xpose.msra.mxu0 0.0
        %1279 = vmatprep.subr.mxu0 0.0
        %1280 = vmatpush1.xpose.msra.mxu0 0.0
        %1281 = vmatprep.subr.mxu0 0.0
        %1282 = vmatpush1.xpose.msra.mxu0 0.0
        %1283 = vmatprep.subr.mxu0 0.0
        %1284 = vmatpush1.xpose.msra.mxu0 0.0
        %1285 = vmatprep.subr.mxu0 0.0
        %1286 = vmatpush1.xpose.msra.mxu0 0.0
        %1287 = vmatprep.subr.mxu0 0.0
        %1288 = vmatpush1.xpose.msra.mxu0 0.0
        %1289 = vmatprep.mubr.f32.mxu0 0.0
        %1290 = vmatmul.mubr.f32.gmra.mrb[0].mxu0 %v1220
        %v1291 = vpop.f32.mrb[0].mxu0
        %v1292 = vadd.f32 0.0, %v1291
        %v1293 = vpop.f32.mrb[0].mxu0
        %1294 = vdwg.mxu0
        %v1295 = vmul.f32 %v760, 0.022097087
        %v1296 = vmul.f32 %v836, 0.022097087
        %v1297 = vmul.f32 %v912, 0.022097087
        %v1298 = vmul.f32 %v988, 0.022097087
        %v1299 = vmul.f32 %v1064, 0.022097087
        %v1300 = vmul.f32 %v1140, 0.022097087
        %v1301 = vmul.f32 %v1216, 0.022097087
        %v1302 = vmul.f32 %v1292, 0.022097087
        %vm1303 = vcmask 64512
        %v1304 = vsel %vm1303, %v1295, -inf
        %1305 = vmax.xlane.f32.xlu0 %v1304
        %v1306 = vpop.xlane.xlu0 %1305
        %v1307 = vsel %vm1303, %v1296, -inf
        %1308 = vmax.xlane.f32.xlu0 %v1307
        %v1309 = vpop.xlane.xlu0 %1308
        %v1310 = vsel %vm1303, %v1297, -inf
        %1311 = vmax.xlane.f32.xlu0 %v1310
        %v1312 = vpop.xlane.xlu0 %1311
        %v1313 = vsel %vm1303, %v1298, -inf
        %1314 = vmax.xlane.f32.xlu0 %v1313
        %v1315 = vpop.xlane.xlu0 %1314
        %v1316 = vsel %vm1303, %v1299, -inf
        %1317 = vmax.xlane.f32.xlu0 %v1316
        %v1318 = vpop.xlane.xlu0 %1317
        %v1319 = vsel %vm1303, %v1300, -inf
        %1320 = vmax.xlane.f32.xlu0 %v1319
        %v1321 = vpop.xlane.xlu0 %1320
        %v1322 = vsel %vm1303, %v1301, -inf
        %1323 = vmax.xlane.f32.xlu0 %v1322
        %v1324 = vpop.xlane.xlu0 %1323
        %v1325 = vsel %vm1303, %v1302, -inf
        %1326 = vmax.xlane.f32.xlu0 %v1325
        %v1327 = vpop.xlane.xlu0 %1326
        %v1328 = vsub.f32 %v1295, %v1306
        %v1329 = vsub.f32 %v1296, %v1309
        %v1330 = vsub.f32 %v1297, %v1312
        %v1331 = vsub.f32 %v1298, %v1315
        %v1332 = vsub.f32 %v1299, %v1318
        %v1333 = vsub.f32 %v1300, %v1321
        %v1334 = vsub.f32 %v1301, %v1324
        %v1335 = vsub.f32 %v1302, %v1327
        %v1336 = vmul.f32 %v1328, 1.442695
        %v1337 = vpow.pop %v1336
        %v1338 = vmul.f32 %v1329, 1.442695
        %v1339 = vpow.pop %v1338
        %v1340 = vmul.f32 %v1330, 1.442695
        %v1341 = vpow.pop %v1340
        %v1342 = vmul.f32 %v1331, 1.442695
        %v1343 = vpow.pop %v1342
        %v1344 = vmul.f32 %v1332, 1.442695
        %v1345 = vpow.pop %v1344
        %v1346 = vmul.f32 %v1333, 1.442695
        %v1347 = vpow.pop %v1346
        %v1348 = vmul.f32 %v1334, 1.442695
        %v1349 = vpow.pop %v1348
        %v1350 = vmul.f32 %v1335, 1.442695
        %v1351 = vpow.pop %v1350
        %v1352 = vsel %vm1303, %v1337, 0.0
        %1353 = vadd.xlane.f32.xlu0 %v1352
        %v1354 = vpop.xlane.xlu0 %1353
        %v1355 = vsel %vm1303, %v1339, 0.0
        %1356 = vadd.xlane.f32.xlu0 %v1355
        %v1357 = vpop.xlane.xlu0 %1356
        %v1358 = vsel %vm1303, %v1341, 0.0
        %1359 = vadd.xlane.f32.xlu0 %v1358
        %v1360 = vpop.xlane.xlu0 %1359
        %v1361 = vsel %vm1303, %v1343, 0.0
        %1362 = vadd.xlane.f32.xlu0 %v1361
        %v1363 = vpop.xlane.xlu0 %1362
        %v1364 = vsel %vm1303, %v1345, 0.0
        %1365 = vadd.xlane.f32.xlu0 %v1364
        %v1366 = vpop.xlane.xlu0 %1365
        %v1367 = vsel %vm1303, %v1347, 0.0
        %1368 = vadd.xlane.f32.xlu0 %v1367
        %v1369 = vpop.xlane.xlu0 %1368
        %v1370 = vsel %vm1303, %v1349, 0.0
        %1371 = vadd.xlane.f32.xlu0 %v1370
        %v1372 = vpop.xlane.xlu0 %1371
        %v1373 = vsel %vm1303, %v1351, 0.0
        %1374 = vadd.xlane.f32.xlu0 %v1373
        %v1375 = vpop.xlane.xlu0 %1374
        %v1376 = vrcp.pop %v1354
        %v1377 = vrcp.pop %v1357
        %v1378 = vrcp.pop %v1360
        %v1379 = vrcp.pop %v1363
        %v1380 = vrcp.pop %v1366
        %v1381 = vrcp.pop %v1369
        %v1382 = vrcp.pop %v1372
        %v1383 = vrcp.pop %v1375
        %v1384 = vmul.f32 %v1337, %v1376
        %v1385 = vmul.f32 %v1339, %v1377
        %v1386 = vmul.f32 %v1341, %v1378
        %v1387 = vmul.f32 %v1343, %v1379
        %v1388 = vmul.f32 %v1345, %v1380
        %v1389 = vmul.f32 %v1347, %v1381
        %v1390 = vmul.f32 %v1349, %v1382
        %v1391 = vmul.f32 %v1351, %v1383
        %v1392 = vld [vmem:[%s7] sm:$0x1]
        %v1394 = vsel %vm1303, %v1392, 0
        %1396 = vmatprep.subr.mxu0 0.0
        %1397 = vmatpush1.msra.mxu0 %v1384
        %1398 = vmatprep.subr.mxu0 0.0
        %1399 = vmatpush1.msra.mxu0 0.0
        %1400 = vmatprep.subr.mxu0 0.0
        %1401 = vmatpush1.msra.mxu0 0.0
        %1402 = vmatprep.subr.mxu0 0.0
        %1403 = vmatpush1.msra.mxu0 0.0
        %1404 = vmatprep.subr.mxu0 0.0
        %1405 = vmatpush1.msra.mxu0 0.0
        %1406 = vmatprep.subr.mxu0 0.0
        %1407 = vmatpush1.msra.mxu0 0.0
        %1408 = vmatprep.subr.mxu0 0.0
        %1409 = vmatpush1.msra.mxu0 0.0
        %1410 = vmatprep.subr.mxu0 0.0
        %1411 = vmatpush1.msra.mxu0 0.0
        %1412 = vmatprep.subr.mxu0 0.0
        %1413 = vmatpush1.msra.mxu0 0.0
        %1414 = vmatprep.subr.mxu0 0.0
        %1415 = vmatpush1.msra.mxu0 0.0
        %1416 = vmatprep.subr.mxu0 0.0
        %1417 = vmatpush1.msra.mxu0 0.0
        %1418 = vmatprep.subr.mxu0 0.0
        %1419 = vmatpush1.msra.mxu0 0.0
        %1420 = vmatprep.subr.mxu0 0.0
        %1421 = vmatpush1.msra.mxu0 0.0
        %1422 = vmatprep.subr.mxu0 0.0
        %1423 = vmatpush1.msra.mxu0 0.0
        %1424 = vmatprep.subr.mxu0 0.0
        %1425 = vmatpush1.msra.mxu0 0.0
        %1426 = vmatprep.subr.mxu0 0.0
        %1427 = vmatpush1.msra.mxu0 0.0
        %1428 = vmatprep.subr.mxu0 0.0
        %1429 = vmatpush1.msra.mxu0 0.0
        %1430 = vmatprep.subr.mxu0 0.0
        %1431 = vmatpush1.msra.mxu0 0.0
        %1432 = vmatprep.subr.mxu0 0.0
        %1433 = vmatpush1.msra.mxu0 0.0
        %1434 = vmatprep.subr.mxu0 0.0
        %1435 = vmatpush1.msra.mxu0 0.0
        %1436 = vmatprep.subr.mxu0 0.0
        %1437 = vmatpush1.msra.mxu0 0.0
        %1438 = vmatprep.subr.mxu0 0.0
        %1439 = vmatpush1.msra.mxu0 0.0
        %1440 = vmatprep.subr.mxu0 0.0
        %1441 = vmatpush1.msra.mxu0 0.0
        %1442 = vmatprep.subr.mxu0 0.0
        %1443 = vmatpush1.msra.mxu0 0.0
        %1444 = vmatprep.subr.mxu0 0.0
        %1445 = vmatpush1.msra.mxu0 0.0
        %1446 = vmatprep.subr.mxu0 0.0
        %1447 = vmatpush1.msra.mxu0 0.0
        %1448 = vmatprep.subr.mxu0 0.0
        %1449 = vmatpush1.msra.mxu0 0.0
        %1450 = vmatprep.subr.mxu0 0.0
        %1451 = vmatpush1.msra.mxu0 0.0
        %1452 = vmatprep.subr.mxu0 0.0
        %1453 = vmatpush1.msra.mxu0 0.0
        %1454 = vmatprep.subr.mxu0 0.0
        %1455 = vmatpush1.msra.mxu0 0.0
        %1456 = vmatprep.subr.mxu0 0.0
        %1457 = vmatpush1.msra.mxu0 0.0
        %1458 = vmatprep.subr.mxu0 0.0
        %1459 = vmatpush1.msra.mxu0 0.0
        %1460 = vmatprep.mubr.f32.mxu0 0.0
        %1461 = vmatmul.mubr.f32.gmra.mrb[0].mxu0 %v1394
        %v1462 = vpop.f32.mrb[0].mxu0
        %v1463 = vadd.f32 0.0, %v1462
        %v1464 = vpop.f32.mrb[0].mxu0
        %1465 = vdwg.mxu0
        %1466 = vmatprep.subr.mxu0 0.0
        %1467 = vmatpush1.msra.mxu0 %v1385
        %1468 = vmatprep.subr.mxu0 0.0
        %1469 = vmatpush1.msra.mxu0 0.0
        %1470 = vmatprep.subr.mxu0 0.0
        %1471 = vmatpush1.msra.mxu0 0.0
        %1472 = vmatprep.subr.mxu0 0.0
        %1473 = vmatpush1.msra.mxu0 0.0
        %1474 = vmatprep.subr.mxu0 0.0
        %1475 = vmatpush1.msra.mxu0 0.0
        %1476 = vmatprep.subr.mxu0 0.0
        %1477 = vmatpush1.msra.mxu0 0.0
        %1478 = vmatprep.subr.mxu0 0.0
        %1479 = vmatpush1.msra.mxu0 0.0
        %1480 = vmatprep.subr.mxu0 0.0
        %1481 = vmatpush1.msra.mxu0 0.0
        %1482 = vmatprep.subr.mxu0 0.0
        %1483 = vmatpush1.msra.mxu0 0.0
        %1484 = vmatprep.subr.mxu0 0.0
        %1485 = vmatpush1.msra.mxu0 0.0
        %1486 = vmatprep.subr.mxu0 0.0
        %1487 = vmatpush1.msra.mxu0 0.0
        %1488 = vmatprep.subr.mxu0 0.0
        %1489 = vmatpush1.msra.mxu0 0.0
        %1490 = vmatprep.subr.mxu0 0.0
        %1491 = vmatpush1.msra.mxu0 0.0
        %1492 = vmatprep.subr.mxu0 0.0
        %1493 = vmatpush1.msra.mxu0 0.0
        %1494 = vmatprep.subr.mxu0 0.0
        %1495 = vmatpush1.msra.mxu0 0.0
        %1496 = vmatprep.subr.mxu0 0.0
        %1497 = vmatpush1.msra.mxu0 0.0
        %1498 = vmatprep.subr.mxu0 0.0
        %1499 = vmatpush1.msra.mxu0 0.0
        %1500 = vmatprep.subr.mxu0 0.0
        %1501 = vmatpush1.msra.mxu0 0.0
        %1502 = vmatprep.subr.mxu0 0.0
        %1503 = vmatpush1.msra.mxu0 0.0
        %1504 = vmatprep.subr.mxu0 0.0
        %1505 = vmatpush1.msra.mxu0 0.0
        %1506 = vmatprep.subr.mxu0 0.0
        %1507 = vmatpush1.msra.mxu0 0.0
        %1508 = vmatprep.subr.mxu0 0.0
        %1509 = vmatpush1.msra.mxu0 0.0
        %1510 = vmatprep.subr.mxu0 0.0
        %1511 = vmatpush1.msra.mxu0 0.0
        %1512 = vmatprep.subr.mxu0 0.0
        %1513 = vmatpush1.msra.mxu0 0.0
        %1514 = vmatprep.subr.mxu0 0.0
        %1515 = vmatpush1.msra.mxu0 0.0
        %1516 = vmatprep.subr.mxu0 0.0
        %1517 = vmatpush1.msra.mxu0 0.0
        %1518 = vmatprep.subr.mxu0 0.0
        %1519 = vmatpush1.msra.mxu0 0.0
        %1520 = vmatprep.subr.mxu0 0.0
        %1521 = vmatpush1.msra.mxu0 0.0
        %1522 = vmatprep.subr.mxu0 0.0
        %1523 = vmatpush1.msra.mxu0 0.0
        %1524 = vmatprep.subr.mxu0 0.0
        %1525 = vmatpush1.msra.mxu0 0.0
        %1526 = vmatprep.subr.mxu0 0.0
        %1527 = vmatpush1.msra.mxu0 0.0
        %1528 = vmatprep.subr.mxu0 0.0
        %1529 = vmatpush1.msra.mxu0 0.0
        %1530 = vmatprep.mubr.f32.mxu0 0.0
        %1531 = vmatmul.mubr.f32.gmra.mrb[0].mxu0 %v1394
        %v1532 = vpop.f32.mrb[0].mxu0
        %v1533 = vadd.f32 0.0, %v1532
        %v1534 = vpop.f32.mrb[0].mxu0
        %1535 = vdwg.mxu0
        %1536 = vmatprep.subr.mxu0 0.0
        %1537 = vmatpush1.msra.mxu0 %v1386
        %1538 = vmatprep.subr.mxu0 0.0
        %1539 = vmatpush1.msra.mxu0 0.0
        %1540 = vmatprep.subr.mxu0 0.0
        %1541 = vmatpush1.msra.mxu0 0.0
        %1542 = vmatprep.subr.mxu0 0.0
        %1543 = vmatpush1.msra.mxu0 0.0
        %1544 = vmatprep.subr.mxu0 0.0
        %1545 = vmatpush1.msra.mxu0 0.0
        %1546 = vmatprep.subr.mxu0 0.0
        %1547 = vmatpush1.msra.mxu0 0.0
        %1548 = vmatprep.subr.mxu0 0.0
        %1549 = vmatpush1.msra.mxu0 0.0
        %1550 = vmatprep.subr.mxu0 0.0
        %1551 = vmatpush1.msra.mxu0 0.0
        %1552 = vmatprep.subr.mxu0 0.0
        %1553 = vmatpush1.msra.mxu0 0.0
        %1554 = vmatprep.subr.mxu0 0.0
        %1555 = vmatpush1.msra.mxu0 0.0
        %1556 = vmatprep.subr.mxu0 0.0
        %1557 = vmatpush1.msra.mxu0 0.0
        %1558 = vmatprep.subr.mxu0 0.0
        %1559 = vmatpush1.msra.mxu0 0.0
        %1560 = vmatprep.subr.mxu0 0.0
        %1561 = vmatpush1.msra.mxu0 0.0
        %1562 = vmatprep.subr.mxu0 0.0
        %1563 = vmatpush1.msra.mxu0 0.0
        %1564 = vmatprep.subr.mxu0 0.0
        %1565 = vmatpush1.msra.mxu0 0.0
        %1566 = vmatprep.subr.mxu0 0.0
        %1567 = vmatpush1.msra.mxu0 0.0
        %1568 = vmatprep.subr.mxu0 0.0
        %1569 = vmatpush1.msra.mxu0 0.0
        %1570 = vmatprep.subr.mxu0 0.0
        %1571 = vmatpush1.msra.mxu0 0.0
        %1572 = vmatprep.subr.mxu0 0.0
        %1573 = vmatpush1.msra.mxu0 0.0
        %1574 = vmatprep.subr.mxu0 0.0
        %1575 = vmatpush1.msra.mxu0 0.0
        %1576 = vmatprep.subr.mxu0 0.0
        %1577 = vmatpush1.msra.mxu0 0.0
        %1578 = vmatprep.subr.mxu0 0.0
        %1579 = vmatpush1.msra.mxu0 0.0
        %1580 = vmatprep.subr.mxu0 0.0
        %1581 = vmatpush1.msra.mxu0 0.0
        %1582 = vmatprep.subr.mxu0 0.0
        %1583 = vmatpush1.msra.mxu0 0.0
        %1584 = vmatprep.subr.mxu0 0.0
        %1585 = vmatpush1.msra.mxu0 0.0
        %1586 = vmatprep.subr.mxu0 0.0
        %1587 = vmatpush1.msra.mxu0 0.0
        %1588 = vmatprep.subr.mxu0 0.0
        %1589 = vmatpush1.msra.mxu0 0.0
        %1590 = vmatprep.subr.mxu0 0.0
        %1591 = vmatpush1.msra.mxu0 0.0
        %1592 = vmatprep.subr.mxu0 0.0
        %1593 = vmatpush1.msra.mxu0 0.0
        %1594 = vmatprep.subr.mxu0 0.0
        %1595 = vmatpush1.msra.mxu0 0.0
        %1596 = vmatprep.subr.mxu0 0.0
        %1597 = vmatpush1.msra.mxu0 0.0
        %1598 = vmatprep.subr.mxu0 0.0
        %1599 = vmatpush1.msra.mxu0 0.0
        %1600 = vmatprep.mubr.f32.mxu0 0.0
        %1601 = vmatmul.mubr.f32.gmra.mrb[0].mxu0 %v1394
        %v1602 = vpop.f32.mrb[0].mxu0
        %v1603 = vadd.f32 0.0, %v1602
        %v1604 = vpop.f32.mrb[0].mxu0
        %1605 = vdwg.mxu0
        %1606 = vmatprep.subr.mxu0 0.0
        %1607 = vmatpush1.msra.mxu0 %v1387
        %1608 = vmatprep.subr.mxu0 0.0
        %1609 = vmatpush1.msra.mxu0 0.0
        %1610 = vmatprep.subr.mxu0 0.0
        %1611 = vmatpush1.msra.mxu0 0.0
        %1612 = vmatprep.subr.mxu0 0.0
        %1613 = vmatpush1.msra.mxu0 0.0
        %1614 = vmatprep.subr.mxu0 0.0
        %1615 = vmatpush1.msra.mxu0 0.0
        %1616 = vmatprep.subr.mxu0 0.0
        %1617 = vmatpush1.msra.mxu0 0.0
        %1618 = vmatprep.subr.mxu0 0.0
        %1619 = vmatpush1.msra.mxu0 0.0
        %1620 = vmatprep.subr.mxu0 0.0
        %1621 = vmatpush1.msra.mxu0 0.0
        %1622 = vmatprep.subr.mxu0 0.0
        %1623 = vmatpush1.msra.mxu0 0.0
        %1624 = vmatprep.subr.mxu0 0.0
        %1625 = vmatpush1.msra.mxu0 0.0
        %1626 = vmatprep.subr.mxu0 0.0
        %1627 = vmatpush1.msra.mxu0 0.0
        %1628 = vmatprep.subr.mxu0 0.0
        %1629 = vmatpush1.msra.mxu0 0.0
        %1630 = vmatprep.subr.mxu0 0.0
        %1631 = vmatpush1.msra.mxu0 0.0
        %1632 = vmatprep.subr.mxu0 0.0
        %1633 = vmatpush1.msra.mxu0 0.0
        %1634 = vmatprep.subr.mxu0 0.0
        %1635 = vmatpush1.msra.mxu0 0.0
        %1636 = vmatprep.subr.mxu0 0.0
        %1637 = vmatpush1.msra.mxu0 0.0
        %1638 = vmatprep.subr.mxu0 0.0
        %1639 = vmatpush1.msra.mxu0 0.0
        %1640 = vmatprep.subr.mxu0 0.0
        %1641 = vmatpush1.msra.mxu0 0.0
        %1642 = vmatprep.subr.mxu0 0.0
        %1643 = vmatpush1.msra.mxu0 0.0
        %1644 = vmatprep.subr.mxu0 0.0
        %1645 = vmatpush1.msra.mxu0 0.0
        %1646 = vmatprep.subr.mxu0 0.0
        %1647 = vmatpush1.msra.mxu0 0.0
        %1648 = vmatprep.subr.mxu0 0.0
        %1649 = vmatpush1.msra.mxu0 0.0
        %1650 = vmatprep.subr.mxu0 0.0
        %1651 = vmatpush1.msra.mxu0 0.0
        %1652 = vmatprep.subr.mxu0 0.0
        %1653 = vmatpush1.msra.mxu0 0.0
        %1654 = vmatprep.subr.mxu0 0.0
        %1655 = vmatpush1.msra.mxu0 0.0
        %1656 = vmatprep.subr.mxu0 0.0
        %1657 = vmatpush1.msra.mxu0 0.0
        %1658 = vmatprep.subr.mxu0 0.0
        %1659 = vmatpush1.msra.mxu0 0.0
        %1660 = vmatprep.subr.mxu0 0.0
        %1661 = vmatpush1.msra.mxu0 0.0
        %1662 = vmatprep.subr.mxu0 0.0
        %1663 = vmatpush1.msra.mxu0 0.0
        %1664 = vmatprep.subr.mxu0 0.0
        %1665 = vmatpush1.msra.mxu0 0.0
        %1666 = vmatprep.subr.mxu0 0.0
        %1667 = vmatpush1.msra.mxu0 0.0
        %1668 = vmatprep.subr.mxu0 0.0
        %1669 = vmatpush1.msra.mxu0 0.0
        %1670 = vmatprep.mubr.f32.mxu0 0.0
        %1671 = vmatmul.mubr.f32.gmra.mrb[0].mxu0 %v1394
        %v1672 = vpop.f32.mrb[0].mxu0
        %v1673 = vadd.f32 0.0, %v1672
        %v1674 = vpop.f32.mrb[0].mxu0
        %1675 = vdwg.mxu0
        %1676 = vmatprep.subr.mxu0 0.0
        %1677 = vmatpush1.msra.mxu0 %v1388
        %1678 = vmatprep.subr.mxu0 0.0
        %1679 = vmatpush1.msra.mxu0 0.0
        %1680 = vmatprep.subr.mxu0 0.0
        %1681 = vmatpush1.msra.mxu0 0.0
        %1682 = vmatprep.subr.mxu0 0.0
        %1683 = vmatpush1.msra.mxu0 0.0
        %1684 = vmatprep.subr.mxu0 0.0
        %1685 = vmatpush1.msra.mxu0 0.0
        %1686 = vmatprep.subr.mxu0 0.0
        %1687 = vmatpush1.msra.mxu0 0.0
        %1688 = vmatprep.subr.mxu0 0.0
        %1689 = vmatpush1.msra.mxu0 0.0
        %1690 = vmatprep.subr.mxu0 0.0
        %1691 = vmatpush1.msra.mxu0 0.0
        %1692 = vmatprep.subr.mxu0 0.0
        %1693 = vmatpush1.msra.mxu0 0.0
        %1694 = vmatprep.subr.mxu0 0.0
        %1695 = vmatpush1.msra.mxu0 0.0
        %1696 = vmatprep.subr.mxu0 0.0
        %1697 = vmatpush1.msra.mxu0 0.0
        %1698 = vmatprep.subr.mxu0 0.0
        %1699 = vmatpush1.msra.mxu0 0.0
        %1700 = vmatprep.subr.mxu0 0.0
        %1701 = vmatpush1.msra.mxu0 0.0
        %1702 = vmatprep.subr.mxu0 0.0
        %1703 = vmatpush1.msra.mxu0 0.0
        %1704 = vmatprep.subr.mxu0 0.0
        %1705 = vmatpush1.msra.mxu0 0.0
        %1706 = vmatprep.subr.mxu0 0.0
        %1707 = vmatpush1.msra.mxu0 0.0
        %1708 = vmatprep.subr.mxu0 0.0
        %1709 = vmatpush1.msra.mxu0 0.0
        %1710 = vmatprep.subr.mxu0 0.0
        %1711 = vmatpush1.msra.mxu0 0.0
        %1712 = vmatprep.subr.mxu0 0.0
        %1713 = vmatpush1.msra.mxu0 0.0
        %1714 = vmatprep.subr.mxu0 0.0
        %1715 = vmatpush1.msra.mxu0 0.0
        %1716 = vmatprep.subr.mxu0 0.0
        %1717 = vmatpush1.msra.mxu0 0.0
        %1718 = vmatprep.subr.mxu0 0.0
        %1719 = vmatpush1.msra.mxu0 0.0
        %1720 = vmatprep.subr.mxu0 0.0
        %1721 = vmatpush1.msra.mxu0 0.0
        %1722 = vmatprep.subr.mxu0 0.0
        %1723 = vmatpush1.msra.mxu0 0.0
        %1724 = vmatprep.subr.mxu0 0.0
        %1725 = vmatpush1.msra.mxu0 0.0
        %1726 = vmatprep.subr.mxu0 0.0
        %1727 = vmatpush1.msra.mxu0 0.0
        %1728 = vmatprep.subr.mxu0 0.0
        %1729 = vmatpush1.msra.mxu0 0.0
        %1730 = vmatprep.subr.mxu0 0.0
        %1731 = vmatpush1.msra.mxu0 0.0
        %1732 = vmatprep.subr.mxu0 0.0
        %1733 = vmatpush1.msra.mxu0 0.0
        %1734 = vmatprep.subr.mxu0 0.0
        %1735 = vmatpush1.msra.mxu0 0.0
        %1736 = vmatprep.subr.mxu0 0.0
        %1737 = vmatpush1.msra.mxu0 0.0
        %1738 = vmatprep.subr.mxu0 0.0
        %1739 = vmatpush1.msra.mxu0 0.0
        %1740 = vmatprep.mubr.f32.mxu0 0.0
        %1741 = vmatmul.mubr.f32.gmra.mrb[0].mxu0 %v1394
        %v1742 = vpop.f32.mrb[0].mxu0
        %v1743 = vadd.f32 0.0, %v1742
        %v1744 = vpop.f32.mrb[0].mxu0
        %1745 = vdwg.mxu0
        %1746 = vmatprep.subr.mxu0 0.0
        %1747 = vmatpush1.msra.mxu0 %v1389
        %1748 = vmatprep.subr.mxu0 0.0
        %1749 = vmatpush1.msra.mxu0 0.0
        %1750 = vmatprep.subr.mxu0 0.0
        %1751 = vmatpush1.msra.mxu0 0.0
        %1752 = vmatprep.subr.mxu0 0.0
        %1753 = vmatpush1.msra.mxu0 0.0
        %1754 = vmatprep.subr.mxu0 0.0
        %1755 = vmatpush1.msra.mxu0 0.0
        %1756 = vmatprep.subr.mxu0 0.0
        %1757 = vmatpush1.msra.mxu0 0.0
        %1758 = vmatprep.subr.mxu0 0.0
        %1759 = vmatpush1.msra.mxu0 0.0
        %1760 = vmatprep.subr.mxu0 0.0
        %1761 = vmatpush1.msra.mxu0 0.0
        %1762 = vmatprep.subr.mxu0 0.0
        %1763 = vmatpush1.msra.mxu0 0.0
        %1764 = vmatprep.subr.mxu0 0.0
        %1765 = vmatpush1.msra.mxu0 0.0
        %1766 = vmatprep.subr.mxu0 0.0
        %1767 = vmatpush1.msra.mxu0 0.0
        %1768 = vmatprep.subr.mxu0 0.0
        %1769 = vmatpush1.msra.mxu0 0.0
        %1770 = vmatprep.subr.mxu0 0.0
        %1771 = vmatpush1.msra.mxu0 0.0
        %1772 = vmatprep.subr.mxu0 0.0
        %1773 = vmatpush1.msra.mxu0 0.0
        %1774 = vmatprep.subr.mxu0 0.0
        %1775 = vmatpush1.msra.mxu0 0.0
        %1776 = vmatprep.subr.mxu0 0.0
        %1777 = vmatpush1.msra.mxu0 0.0
        %1778 = vmatprep.subr.mxu0 0.0
        %1779 = vmatpush1.msra.mxu0 0.0
        %1780 = vmatprep.subr.mxu0 0.0
        %1781 = vmatpush1.msra.mxu0 0.0
        %1782 = vmatprep.subr.mxu0 0.0
        %1783 = vmatpush1.msra.mxu0 0.0
        %1784 = vmatprep.subr.mxu0 0.0
        %1785 = vmatpush1.msra.mxu0 0.0
        %1786 = vmatprep.subr.mxu0 0.0
        %1787 = vmatpush1.msra.mxu0 0.0
        %1788 = vmatprep.subr.mxu0 0.0
        %1789 = vmatpush1.msra.mxu0 0.0
        %1790 = vmatprep.subr.mxu0 0.0
        %1791 = vmatpush1.msra.mxu0 0.0
        %1792 = vmatprep.subr.mxu0 0.0
        %1793 = vmatpush1.msra.mxu0 0.0
        %1794 = vmatprep.subr.mxu0 0.0
        %1795 = vmatpush1.msra.mxu0 0.0
        %1796 = vmatprep.subr.mxu0 0.0
        %1797 = vmatpush1.msra.mxu0 0.0
        %1798 = vmatprep.subr.mxu0 0.0
        %1799 = vmatpush1.msra.mxu0 0.0
        %1800 = vmatprep.subr.mxu0 0.0
        %1801 = vmatpush1.msra.mxu0 0.0
        %1802 = vmatprep.subr.mxu0 0.0
        %1803 = vmatpush1.msra.mxu0 0.0
        %1804 = vmatprep.subr.mxu0 0.0
        %1805 = vmatpush1.msra.mxu0 0.0
        %1806 = vmatprep.subr.mxu0 0.0
        %1807 = vmatpush1.msra.mxu0 0.0
        %1808 = vmatprep.subr.mxu0 0.0
        %1809 = vmatpush1.msra.mxu0 0.0
        %1810 = vmatprep.mubr.f32.mxu0 0.0
        %1811 = vmatmul.mubr.f32.gmra.mrb[0].mxu0 %v1394
        %v1812 = vpop.f32.mrb[0].mxu0
        %v1813 = vadd.f32 0.0, %v1812
        %v1814 = vpop.f32.mrb[0].mxu0
        %1815 = vdwg.mxu0
        %1816 = vmatprep.subr.mxu0 0.0
        %1817 = vmatpush1.msra.mxu0 %v1390
        %1818 = vmatprep.subr.mxu0 0.0
        %1819 = vmatpush1.msra.mxu0 0.0
        %1820 = vmatprep.subr.mxu0 0.0
        %1821 = vmatpush1.msra.mxu0 0.0
        %1822 = vmatprep.subr.mxu0 0.0
        %1823 = vmatpush1.msra.mxu0 0.0
        %1824 = vmatprep.subr.mxu0 0.0
        %1825 = vmatpush1.msra.mxu0 0.0
        %1826 = vmatprep.subr.mxu0 0.0
        %1827 = vmatpush1.msra.mxu0 0.0
        %1828 = vmatprep.subr.mxu0 0.0
        %1829 = vmatpush1.msra.mxu0 0.0
        %1830 = vmatprep.subr.mxu0 0.0
        %1831 = vmatpush1.msra.mxu0 0.0
        %1832 = vmatprep.subr.mxu0 0.0
        %1833 = vmatpush1.msra.mxu0 0.0
        %1834 = vmatprep.subr.mxu0 0.0
        %1835 = vmatpush1.msra.mxu0 0.0
        %1836 = vmatprep.subr.mxu0 0.0
        %1837 = vmatpush1.msra.mxu0 0.0
        %1838 = vmatprep.subr.mxu0 0.0
        %1839 = vmatpush1.msra.mxu0 0.0
        %1840 = vmatprep.subr.mxu0 0.0
        %1841 = vmatpush1.msra.mxu0 0.0
        %1842 = vmatprep.subr.mxu0 0.0
        %1843 = vmatpush1.msra.mxu0 0.0
        %1844 = vmatprep.subr.mxu0 0.0
        %1845 = vmatpush1.msra.mxu0 0.0
        %1846 = vmatprep.subr.mxu0 0.0
        %1847 = vmatpush1.msra.mxu0 0.0
        %1848 = vmatprep.subr.mxu0 0.0
        %1849 = vmatpush1.msra.mxu0 0.0
        %1850 = vmatprep.subr.mxu0 0.0
        %1851 = vmatpush1.msra.mxu0 0.0
        %1852 = vmatprep.subr.mxu0 0.0
        %1853 = vmatpush1.msra.mxu0 0.0
        %1854 = vmatprep.subr.mxu0 0.0
        %1855 = vmatpush1.msra.mxu0 0.0
        %1856 = vmatprep.subr.mxu0 0.0
        %1857 = vmatpush1.msra.mxu0 0.0
        %1858 = vmatprep.subr.mxu0 0.0
        %1859 = vmatpush1.msra.mxu0 0.0
        %1860 = vmatprep.subr.mxu0 0.0
        %1861 = vmatpush1.msra.mxu0 0.0
        %1862 = vmatprep.subr.mxu0 0.0
        %1863 = vmatpush1.msra.mxu0 0.0
        %1864 = vmatprep.subr.mxu0 0.0
        %1865 = vmatpush1.msra.mxu0 0.0
        %1866 = vmatprep.subr.mxu0 0.0
        %1867 = vmatpush1.msra.mxu0 0.0
        %1868 = vmatprep.subr.mxu0 0.0
        %1869 = vmatpush1.msra.mxu0 0.0
        %1870 = vmatprep.subr.mxu0 0.0
        %1871 = vmatpush1.msra.mxu0 0.0
        %1872 = vmatprep.subr.mxu0 0.0
        %1873 = vmatpush1.msra.mxu0 0.0
        %1874 = vmatprep.subr.mxu0 0.0
        %1875 = vmatpush1.msra.mxu0 0.0
        %1876 = vmatprep.subr.mxu0 0.0
        %1877 = vmatpush1.msra.mxu0 0.0
        %1878 = vmatprep.subr.mxu0 0.0
        %1879 = vmatpush1.msra.mxu0 0.0
        %1880 = vmatprep.mubr.f32.mxu0 0.0
        %1881 = vmatmul.mubr.f32.gmra.mrb[0].mxu0 %v1394
        %v1882 = vpop.f32.mrb[0].mxu0
        %v1883 = vadd.f32 0.0, %v1882
        %v1884 = vpop.f32.mrb[0].mxu0
        %1885 = vdwg.mxu0
        %1886 = vmatprep.subr.mxu0 0.0
        %1887 = vmatpush1.msra.mxu0 %v1391
        %1888 = vmatprep.subr.mxu0 0.0
        %1889 = vmatpush1.msra.mxu0 0.0
        %1890 = vmatprep.subr.mxu0 0.0
        %1891 = vmatpush1.msra.mxu0 0.0
        %1892 = vmatprep.subr.mxu0 0.0
        %1893 = vmatpush1.msra.mxu0 0.0
        %1894 = vmatprep.subr.mxu0 0.0
        %1895 = vmatpush1.msra.mxu0 0.0
        %1896 = vmatprep.subr.mxu0 0.0
        %1897 = vmatpush1.msra.mxu0 0.0
        %1898 = vmatprep.subr.mxu0 0.0
        %1899 = vmatpush1.msra.mxu0 0.0
        %1900 = vmatprep.subr.mxu0 0.0
        %1901 = vmatpush1.msra.mxu0 0.0
        %1902 = vmatprep.subr.mxu0 0.0
        %1903 = vmatpush1.msra.mxu0 0.0
        %1904 = vmatprep.subr.mxu0 0.0
        %1905 = vmatpush1.msra.mxu0 0.0
        %1906 = vmatprep.subr.mxu0 0.0
        %1907 = vmatpush1.msra.mxu0 0.0
        %1908 = vmatprep.subr.mxu0 0.0
        %1909 = vmatpush1.msra.mxu0 0.0
        %1910 = vmatprep.subr.mxu0 0.0
        %1911 = vmatpush1.msra.mxu0 0.0
        %1912 = vmatprep.subr.mxu0 0.0
        %1913 = vmatpush1.msra.mxu0 0.0
        %1914 = vmatprep.subr.mxu0 0.0
        %1915 = vmatpush1.msra.mxu0 0.0
        %1916 = vmatprep.subr.mxu0 0.0
        %1917 = vmatpush1.msra.mxu0 0.0
        %1918 = vmatprep.subr.mxu0 0.0
        %1919 = vmatpush1.msra.mxu0 0.0
        %1920 = vmatprep.subr.mxu0 0.0
        %1921 = vmatpush1.msra.mxu0 0.0
        %1922 = vmatprep.subr.mxu0 0.0
        %1923 = vmatpush1.msra.mxu0 0.0
        %1924 = vmatprep.subr.mxu0 0.0
        %1925 = vmatpush1.msra.mxu0 0.0
        %1926 = vmatprep.subr.mxu0 0.0
        %1927 = vmatpush1.msra.mxu0 0.0
        %1928 = vmatprep.subr.mxu0 0.0
        %1929 = vmatpush1.msra.mxu0 0.0
        %1930 = vmatprep.subr.mxu0 0.0
        %1931 = vmatpush1.msra.mxu0 0.0
        %1932 = vmatprep.subr.mxu0 0.0
        %1933 = vmatpush1.msra.mxu0 0.0
        %1934 = vmatprep.subr.mxu0 0.0
        %1935 = vmatpush1.msra.mxu0 0.0
        %1936 = vmatprep.subr.mxu0 0.0
        %1937 = vmatpush1.msra.mxu0 0.0
        %1938 = vmatprep.subr.mxu0 0.0
        %1939 = vmatpush1.msra.mxu0 0.0
        %1940 = vmatprep.subr.mxu0 0.0
        %1941 = vmatpush1.msra.mxu0 0.0
        %1942 = vmatprep.subr.mxu0 0.0
        %1943 = vmatpush1.msra.mxu0 0.0
        %1944 = vmatprep.subr.mxu0 0.0
        %1945 = vmatpush1.msra.mxu0 0.0
        %1946 = vmatprep.subr.mxu0 0.0
        %1947 = vmatpush1.msra.mxu0 0.0
        %1948 = vmatprep.subr.mxu0 0.0
        %1949 = vmatpush1.msra.mxu0 0.0
        %1950 = vmatprep.mubr.f32.mxu0 0.0
        %1951 = vmatmul.mubr.f32.gmra.mrb[0].mxu0 %v1394
        %v1952 = vpop.f32.mrb[0].mxu0
        %v1953 = vadd.f32 0.0, %v1952
        %v1954 = vpop.f32.mrb[0].mxu0
        %1955 = vdwg.mxu0
        %v1957 = vsel %vm1303, %v1463, 0
        %1959 = vmatprep.subr.mxu0 0.0
        %1960 = vmatpush1.msra.mxu0 %v649
        %1961 = vmatprep.subr.mxu0 0.0
        %1962 = vmatpush1.msra.mxu0 0.0
        %1963 = vmatprep.subr.mxu0 0.0
        %1964 = vmatpush1.msra.mxu0 0.0
        %1965 = vmatprep.subr.mxu0 0.0
        %1966 = vmatpush1.msra.mxu0 0.0
        %1967 = vmatprep.subr.mxu0 0.0
        %1968 = vmatpush1.msra.mxu0 0.0
        %1969 = vmatprep.subr.mxu0 0.0
        %1970 = vmatpush1.msra.mxu0 0.0
        %1971 = vmatprep.subr.mxu0 0.0
        %1972 = vmatpush1.msra.mxu0 0.0
        %1973 = vmatprep.subr.mxu0 0.0
        %1974 = vmatpush1.msra.mxu0 0.0
        %1975 = vmatprep.subr.mxu0 0.0
        %1976 = vmatpush1.msra.mxu0 0.0
        %1977 = vmatprep.subr.mxu0 0.0
        %1978 = vmatpush1.msra.mxu0 0.0
        %1979 = vmatprep.subr.mxu0 0.0
        %1980 = vmatpush1.msra.mxu0 0.0
        %1981 = vmatprep.subr.mxu0 0.0
        %1982 = vmatpush1.msra.mxu0 0.0
        %1983 = vmatprep.subr.mxu0 0.0
        %1984 = vmatpush1.msra.mxu0 0.0
        %1985 = vmatprep.subr.mxu0 0.0
        %1986 = vmatpush1.msra.mxu0 0.0
        %1987 = vmatprep.subr.mxu0 0.0
        %1988 = vmatpush1.msra.mxu0 0.0
        %1989 = vmatprep.subr.mxu0 0.0
        %1990 = vmatpush1.msra.mxu0 0.0
        %1991 = vmatprep.subr.mxu0 0.0
        %1992 = vmatpush1.msra.mxu0 0.0
        %1993 = vmatprep.subr.mxu0 0.0
        %1994 = vmatpush1.msra.mxu0 0.0
        %1995 = vmatprep.subr.mxu0 0.0
        %1996 = vmatpush1.msra.mxu0 0.0
        %1997 = vmatprep.subr.mxu0 0.0
        %1998 = vmatpush1.msra.mxu0 0.0
        %1999 = vmatprep.subr.mxu0 0.0
        %2000 = vmatpush1.msra.mxu0 0.0
        %2001 = vmatprep.subr.mxu0 0.0
        %2002 = vmatpush1.msra.mxu0 0.0
        %2003 = vmatprep.subr.mxu0 0.0
        %2004 = vmatpush1.msra.mxu0 0.0
        %2005 = vmatprep.subr.mxu0 0.0
        %2006 = vmatpush1.msra.mxu0 0.0
        %2007 = vmatprep.subr.mxu0 0.0
        %2008 = vmatpush1.msra.mxu0 0.0
        %2009 = vmatprep.subr.mxu0 0.0
        %2010 = vmatpush1.msra.mxu0 0.0
        %2011 = vmatprep.subr.mxu0 0.0
        %2012 = vmatpush1.msra.mxu0 0.0
        %2013 = vmatprep.subr.mxu0 0.0
        %2014 = vmatpush1.msra.mxu0 0.0
        %2015 = vmatprep.subr.mxu0 0.0
        %2016 = vmatpush1.msra.mxu0 0.0
        %2017 = vmatprep.subr.mxu0 0.0
        %2018 = vmatpush1.msra.mxu0 0.0
        %2019 = vmatprep.subr.mxu0 0.0
        %2020 = vmatpush1.msra.mxu0 0.0
        %2021 = vmatprep.subr.mxu0 0.0
        %2022 = vmatpush1.msra.mxu0 0.0
        %2023 = vmatprep.mubr.f32.mxu0 0.0
        %2024 = vmatmul.mubr.f32.gmra.mrb[0].mxu0 %v1957
        %v2025 = vpop.f32.mrb[0].mxu0
        %v2026 = vadd.f32 0.0, %v2025
        %v2027 = vpop.f32.mrb[0].mxu0
        %2028 = vdwg.mxu0
        %v2030 = vsel %vm1303, %v1533, 0
        %2032 = vmatprep.subr.mxu0 0.0
        %2033 = vmatpush1.msra.mxu0 %v654
        %2034 = vmatprep.subr.mxu0 0.0
        %2035 = vmatpush1.msra.mxu0 0.0
        %2036 = vmatprep.subr.mxu0 0.0
        %2037 = vmatpush1.msra.mxu0 0.0
        %2038 = vmatprep.subr.mxu0 0.0
        %2039 = vmatpush1.msra.mxu0 0.0
        %2040 = vmatprep.subr.mxu0 0.0
        %2041 = vmatpush1.msra.mxu0 0.0
        %2042 = vmatprep.subr.mxu0 0.0
        %2043 = vmatpush1.msra.mxu0 0.0
        %2044 = vmatprep.subr.mxu0 0.0
        %2045 = vmatpush1.msra.mxu0 0.0
        %2046 = vmatprep.subr.mxu0 0.0
        %2047 = vmatpush1.msra.mxu0 0.0
        %2048 = vmatprep.subr.mxu0 0.0
        %2049 = vmatpush1.msra.mxu0 0.0
        %2050 = vmatprep.subr.mxu0 0.0
        %2051 = vmatpush1.msra.mxu0 0.0
        %2052 = vmatprep.subr.mxu0 0.0
        %2053 = vmatpush1.msra.mxu0 0.0
        %2054 = vmatprep.subr.mxu0 0.0
        %2055 = vmatpush1.msra.mxu0 0.0
        %2056 = vmatprep.subr.mxu0 0.0
        %2057 = vmatpush1.msra.mxu0 0.0
        %2058 = vmatprep.subr.mxu0 0.0
        %2059 = vmatpush1.msra.mxu0 0.0
        %2060 = vmatprep.subr.mxu0 0.0
        %2061 = vmatpush1.msra.mxu0 0.0
        %2062 = vmatprep.subr.mxu0 0.0
        %2063 = vmatpush1.msra.mxu0 0.0
        %2064 = vmatprep.subr.mxu0 0.0
        %2065 = vmatpush1.msra.mxu0 0.0
        %2066 = vmatprep.subr.mxu0 0.0
        %2067 = vmatpush1.msra.mxu0 0.0
        %2068 = vmatprep.subr.mxu0 0.0
        %2069 = vmatpush1.msra.mxu0 0.0
        %2070 = vmatprep.subr.mxu0 0.0
        %2071 = vmatpush1.msra.mxu0 0.0
        %2072 = vmatprep.subr.mxu0 0.0
        %2073 = vmatpush1.msra.mxu0 0.0
        %2074 = vmatprep.subr.mxu0 0.0
        %2075 = vmatpush1.msra.mxu0 0.0
        %2076 = vmatprep.subr.mxu0 0.0
        %2077 = vmatpush1.msra.mxu0 0.0
        %2078 = vmatprep.subr.mxu0 0.0
        %2079 = vmatpush1.msra.mxu0 0.0
        %2080 = vmatprep.subr.mxu0 0.0
        %2081 = vmatpush1.msra.mxu0 0.0
        %2082 = vmatprep.subr.mxu0 0.0
        %2083 = vmatpush1.msra.mxu0 0.0
        %2084 = vmatprep.subr.mxu0 0.0
        %2085 = vmatpush1.msra.mxu0 0.0
        %2086 = vmatprep.subr.mxu0 0.0
        %2087 = vmatpush1.msra.mxu0 0.0
        %2088 = vmatprep.subr.mxu0 0.0
        %2089 = vmatpush1.msra.mxu0 0.0
        %2090 = vmatprep.subr.mxu0 0.0
        %2091 = vmatpush1.msra.mxu0 0.0
        %2092 = vmatprep.subr.mxu0 0.0
        %2093 = vmatpush1.msra.mxu0 0.0
        %2094 = vmatprep.subr.mxu0 0.0
        %2095 = vmatpush1.msra.mxu0 0.0
        %2096 = vmatprep.mubr.f32.mxu0 0.0
        %2097 = vmatmul.mubr.f32.gmra.mrb[0].mxu0 %v2030
        %v2098 = vpop.f32.mrb[0].mxu0
        %v2099 = vadd.f32 0.0, %v2098
        %v2100 = vpop.f32.mrb[0].mxu0
        %2101 = vdwg.mxu0
        %v2103 = vsel %vm1303, %v1603, 0
        %2105 = vmatprep.subr.mxu0 0.0
        %2106 = vmatpush1.msra.mxu0 %v659
        %2107 = vmatprep.subr.mxu0 0.0
        %2108 = vmatpush1.msra.mxu0 0.0
        %2109 = vmatprep.subr.mxu0 0.0
        %2110 = vmatpush1.msra.mxu0 0.0
        %2111 = vmatprep.subr.mxu0 0.0
        %2112 = vmatpush1.msra.mxu0 0.0
        %2113 = vmatprep.subr.mxu0 0.0
        %2114 = vmatpush1.msra.mxu0 0.0
        %2115 = vmatprep.subr.mxu0 0.0
        %2116 = vmatpush1.msra.mxu0 0.0
        %2117 = vmatprep.subr.mxu0 0.0
        %2118 = vmatpush1.msra.mxu0 0.0
        %2119 = vmatprep.subr.mxu0 0.0
        %2120 = vmatpush1.msra.mxu0 0.0
        %2121 = vmatprep.subr.mxu0 0.0
        %2122 = vmatpush1.msra.mxu0 0.0
        %2123 = vmatprep.subr.mxu0 0.0
        %2124 = vmatpush1.msra.mxu0 0.0
        %2125 = vmatprep.subr.mxu0 0.0
        %2126 = vmatpush1.msra.mxu0 0.0
        %2127 = vmatprep.subr.mxu0 0.0
        %2128 = vmatpush1.msra.mxu0 0.0
        %2129 = vmatprep.subr.mxu0 0.0
        %2130 = vmatpush1.msra.mxu0 0.0
        %2131 = vmatprep.subr.mxu0 0.0
        %2132 = vmatpush1.msra.mxu0 0.0
        %2133 = vmatprep.subr.mxu0 0.0
        %2134 = vmatpush1.msra.mxu0 0.0
        %2135 = vmatprep.subr.mxu0 0.0
        %2136 = vmatpush1.msra.mxu0 0.0
        %2137 = vmatprep.subr.mxu0 0.0
        %2138 = vmatpush1.msra.mxu0 0.0
        %2139 = vmatprep.subr.mxu0 0.0
        %2140 = vmatpush1.msra.mxu0 0.0
        %2141 = vmatprep.subr.mxu0 0.0
        %2142 = vmatpush1.msra.mxu0 0.0
        %2143 = vmatprep.subr.mxu0 0.0
        %2144 = vmatpush1.msra.mxu0 0.0
        %2145 = vmatprep.subr.mxu0 0.0
        %2146 = vmatpush1.msra.mxu0 0.0
        %2147 = vmatprep.subr.mxu0 0.0
        %2148 = vmatpush1.msra.mxu0 0.0
        %2149 = vmatprep.subr.mxu0 0.0
        %2150 = vmatpush1.msra.mxu0 0.0
        %2151 = vmatprep.subr.mxu0 0.0
        %2152 = vmatpush1.msra.mxu0 0.0
        %2153 = vmatprep.subr.mxu0 0.0
        %2154 = vmatpush1.msra.mxu0 0.0
        %2155 = vmatprep.subr.mxu0 0.0
        %2156 = vmatpush1.msra.mxu0 0.0
        %2157 = vmatprep.subr.mxu0 0.0
        %2158 = vmatpush1.msra.mxu0 0.0
        %2159 = vmatprep.subr.mxu0 0.0
        %2160 = vmatpush1.msra.mxu0 0.0
        %2161 = vmatprep.subr.mxu0 0.0
        %2162 = vmatpush1.msra.mxu0 0.0
        %2163 = vmatprep.subr.mxu0 0.0
        %2164 = vmatpush1.msra.mxu0 0.0
        %2165 = vmatprep.subr.mxu0 0.0
        %2166 = vmatpush1.msra.mxu0 0.0
        %2167 = vmatprep.subr.mxu0 0.0
        %2168 = vmatpush1.msra.mxu0 0.0
        %2169 = vmatprep.mubr.f32.mxu0 0.0
        %2170 = vmatmul.mubr.f32.gmra.mrb[0].mxu0 %v2103
        %v2171 = vpop.f32.mrb[0].mxu0
        %v2172 = vadd.f32 0.0, %v2171
        %v2173 = vpop.f32.mrb[0].mxu0
        %2174 = vdwg.mxu0
        %v2176 = vsel %vm1303, %v1673, 0
        %2178 = vmatprep.subr.mxu0 0.0
        %2179 = vmatpush1.msra.mxu0 %v664
        %2180 = vmatprep.subr.mxu0 0.0
        %2181 = vmatpush1.msra.mxu0 0.0
        %2182 = vmatprep.subr.mxu0 0.0
        %2183 = vmatpush1.msra.mxu0 0.0
        %2184 = vmatprep.subr.mxu0 0.0
        %2185 = vmatpush1.msra.mxu0 0.0
        %2186 = vmatprep.subr.mxu0 0.0
        %2187 = vmatpush1.msra.mxu0 0.0
        %2188 = vmatprep.subr.mxu0 0.0
        %2189 = vmatpush1.msra.mxu0 0.0
        %2190 = vmatprep.subr.mxu0 0.0
        %2191 = vmatpush1.msra.mxu0 0.0
        %2192 = vmatprep.subr.mxu0 0.0
        %2193 = vmatpush1.msra.mxu0 0.0
        %2194 = vmatprep.subr.mxu0 0.0
        %2195 = vmatpush1.msra.mxu0 0.0
        %2196 = vmatprep.subr.mxu0 0.0
        %2197 = vmatpush1.msra.mxu0 0.0
        %2198 = vmatprep.subr.mxu0 0.0
        %2199 = vmatpush1.msra.mxu0 0.0
        %2200 = vmatprep.subr.mxu0 0.0
        %2201 = vmatpush1.msra.mxu0 0.0
        %2202 = vmatprep.subr.mxu0 0.0
        %2203 = vmatpush1.msra.mxu0 0.0
        %2204 = vmatprep.subr.mxu0 0.0
        %2205 = vmatpush1.msra.mxu0 0.0
        %2206 = vmatprep.subr.mxu0 0.0
        %2207 = vmatpush1.msra.mxu0 0.0
        %2208 = vmatprep.subr.mxu0 0.0
        %2209 = vmatpush1.msra.mxu0 0.0
        %2210 = vmatprep.subr.mxu0 0.0
        %2211 = vmatpush1.msra.mxu0 0.0
        %2212 = vmatprep.subr.mxu0 0.0
        %2213 = vmatpush1.msra.mxu0 0.0
        %2214 = vmatprep.subr.mxu0 0.0
        %2215 = vmatpush1.msra.mxu0 0.0
        %2216 = vmatprep.subr.mxu0 0.0
        %2217 = vmatpush1.msra.mxu0 0.0
        %2218 = vmatprep.subr.mxu0 0.0
        %2219 = vmatpush1.msra.mxu0 0.0
        %2220 = vmatprep.subr.mxu0 0.0
        %2221 = vmatpush1.msra.mxu0 0.0
        %2222 = vmatprep.subr.mxu0 0.0
        %2223 = vmatpush1.msra.mxu0 0.0
        %2224 = vmatprep.subr.mxu0 0.0
        %2225 = vmatpush1.msra.mxu0 0.0
        %2226 = vmatprep.subr.mxu0 0.0
        %2227 = vmatpush1.msra.mxu0 0.0
        %2228 = vmatprep.subr.mxu0 0.0
        %2229 = vmatpush1.msra.mxu0 0.0
        %2230 = vmatprep.subr.mxu0 0.0
        %2231 = vmatpush1.msra.mxu0 0.0
        %2232 = vmatprep.subr.mxu0 0.0
        %2233 = vmatpush1.msra.mxu0 0.0
        %2234 = vmatprep.subr.mxu0 0.0
        %2235 = vmatpush1.msra.mxu0 0.0
        %2236 = vmatprep.subr.mxu0 0.0
        %2237 = vmatpush1.msra.mxu0 0.0
        %2238 = vmatprep.subr.mxu0 0.0
        %2239 = vmatpush1.msra.mxu0 0.0
        %2240 = vmatprep.subr.mxu0 0.0
        %2241 = vmatpush1.msra.mxu0 0.0
        %2242 = vmatprep.mubr.f32.mxu0 0.0
        %2243 = vmatmul.mubr.f32.gmra.mrb[0].mxu0 %v2176
        %v2244 = vpop.f32.mrb[0].mxu0
        %v2245 = vadd.f32 0.0, %v2244
        %v2246 = vpop.f32.mrb[0].mxu0
        %2247 = vdwg.mxu0
        %v2249 = vsel %vm1303, %v1743, 0
        %2251 = vmatprep.subr.mxu0 0.0
        %2252 = vmatpush1.msra.mxu0 %v669
        %2253 = vmatprep.subr.mxu0 0.0
        %2254 = vmatpush1.msra.mxu0 0.0
        %2255 = vmatprep.subr.mxu0 0.0
        %2256 = vmatpush1.msra.mxu0 0.0
        %2257 = vmatprep.subr.mxu0 0.0
        %2258 = vmatpush1.msra.mxu0 0.0
        %2259 = vmatprep.subr.mxu0 0.0
        %2260 = vmatpush1.msra.mxu0 0.0
        %2261 = vmatprep.subr.mxu0 0.0
        %2262 = vmatpush1.msra.mxu0 0.0
        %2263 = vmatprep.subr.mxu0 0.0
        %2264 = vmatpush1.msra.mxu0 0.0
        %2265 = vmatprep.subr.mxu0 0.0
        %2266 = vmatpush1.msra.mxu0 0.0
        %2267 = vmatprep.subr.mxu0 0.0
        %2268 = vmatpush1.msra.mxu0 0.0
        %2269 = vmatprep.subr.mxu0 0.0
        %2270 = vmatpush1.msra.mxu0 0.0
        %2271 = vmatprep.subr.mxu0 0.0
        %2272 = vmatpush1.msra.mxu0 0.0
        %2273 = vmatprep.subr.mxu0 0.0
        %2274 = vmatpush1.msra.mxu0 0.0
        %2275 = vmatprep.subr.mxu0 0.0
        %2276 = vmatpush1.msra.mxu0 0.0
        %2277 = vmatprep.subr.mxu0 0.0
        %2278 = vmatpush1.msra.mxu0 0.0
        %2279 = vmatprep.subr.mxu0 0.0
        %2280 = vmatpush1.msra.mxu0 0.0
        %2281 = vmatprep.subr.mxu0 0.0
        %2282 = vmatpush1.msra.mxu0 0.0
        %2283 = vmatprep.subr.mxu0 0.0
        %2284 = vmatpush1.msra.mxu0 0.0
        %2285 = vmatprep.subr.mxu0 0.0
        %2286 = vmatpush1.msra.mxu0 0.0
        %2287 = vmatprep.subr.mxu0 0.0
        %2288 = vmatpush1.msra.mxu0 0.0
        %2289 = vmatprep.subr.mxu0 0.0
        %2290 = vmatpush1.msra.mxu0 0.0
        %2291 = vmatprep.subr.mxu0 0.0
        %2292 = vmatpush1.msra.mxu0 0.0
        %2293 = vmatprep.subr.mxu0 0.0
        %2294 = vmatpush1.msra.mxu0 0.0
        %2295 = vmatprep.subr.mxu0 0.0
        %2296 = vmatpush1.msra.mxu0 0.0
        %2297 = vmatprep.subr.mxu0 0.0
        %2298 = vmatpush1.msra.mxu0 0.0
        %2299 = vmatprep.subr.mxu0 0.0
        %2300 = vmatpush1.msra.mxu0 0.0
        %2301 = vmatprep.subr.mxu0 0.0
        %2302 = vmatpush1.msra.mxu0 0.0
        %2303 = vmatprep.subr.mxu0 0.0
        %2304 = vmatpush1.msra.mxu0 0.0
        %2305 = vmatprep.subr.mxu0 0.0
        %2306 = vmatpush1.msra.mxu0 0.0
        %2307 = vmatprep.subr.mxu0 0.0
        %2308 = vmatpush1.msra.mxu0 0.0
        %2309 = vmatprep.subr.mxu0 0.0
        %2310 = vmatpush1.msra.mxu0 0.0
        %2311 = vmatprep.subr.mxu0 0.0
        %2312 = vmatpush1.msra.mxu0 0.0
        %2313 = vmatprep.subr.mxu0 0.0
        %2314 = vmatpush1.msra.mxu0 0.0
        %2315 = vmatprep.mubr.f32.mxu0 0.0
        %2316 = vmatmul.mubr.f32.gmra.mrb[0].mxu0 %v2249
        %v2317 = vpop.f32.mrb[0].mxu0
        %v2318 = vadd.f32 0.0, %v2317
        %v2319 = vpop.f32.mrb[0].mxu0
        %2320 = vdwg.mxu0
        %v2322 = vsel %vm1303, %v1813, 0
        %2324 = vmatprep.subr.mxu0 0.0
        %2325 = vmatpush1.msra.mxu0 %v674
        %2326 = vmatprep.subr.mxu0 0.0
        %2327 = vmatpush1.msra.mxu0 0.0
        %2328 = vmatprep.subr.mxu0 0.0
        %2329 = vmatpush1.msra.mxu0 0.0
        %2330 = vmatprep.subr.mxu0 0.0
        %2331 = vmatpush1.msra.mxu0 0.0
        %2332 = vmatprep.subr.mxu0 0.0
        %2333 = vmatpush1.msra.mxu0 0.0
        %2334 = vmatprep.subr.mxu0 0.0
        %2335 = vmatpush1.msra.mxu0 0.0
        %2336 = vmatprep.subr.mxu0 0.0
        %2337 = vmatpush1.msra.mxu0 0.0
        %2338 = vmatprep.subr.mxu0 0.0
        %2339 = vmatpush1.msra.mxu0 0.0
        %2340 = vmatprep.subr.mxu0 0.0
        %2341 = vmatpush1.msra.mxu0 0.0
        %2342 = vmatprep.subr.mxu0 0.0
        %2343 = vmatpush1.msra.mxu0 0.0
        %2344 = vmatprep.subr.mxu0 0.0
        %2345 = vmatpush1.msra.mxu0 0.0
        %2346 = vmatprep.subr.mxu0 0.0
        %2347 = vmatpush1.msra.mxu0 0.0
        %2348 = vmatprep.subr.mxu0 0.0
        %2349 = vmatpush1.msra.mxu0 0.0
        %2350 = vmatprep.subr.mxu0 0.0
        %2351 = vmatpush1.msra.mxu0 0.0
        %2352 = vmatprep.subr.mxu0 0.0
        %2353 = vmatpush1.msra.mxu0 0.0
        %2354 = vmatprep.subr.mxu0 0.0
        %2355 = vmatpush1.msra.mxu0 0.0
        %2356 = vmatprep.subr.mxu0 0.0
        %2357 = vmatpush1.msra.mxu0 0.0
        %2358 = vmatprep.subr.mxu0 0.0
        %2359 = vmatpush1.msra.mxu0 0.0
        %2360 = vmatprep.subr.mxu0 0.0
        %2361 = vmatpush1.msra.mxu0 0.0
        %2362 = vmatprep.subr.mxu0 0.0
        %2363 = vmatpush1.msra.mxu0 0.0
        %2364 = vmatprep.subr.mxu0 0.0
        %2365 = vmatpush1.msra.mxu0 0.0
        %2366 = vmatprep.subr.mxu0 0.0
        %2367 = vmatpush1.msra.mxu0 0.0
        %2368 = vmatprep.subr.mxu0 0.0
        %2369 = vmatpush1.msra.mxu0 0.0
        %2370 = vmatprep.subr.mxu0 0.0
        %2371 = vmatpush1.msra.mxu0 0.0
        %2372 = vmatprep.subr.mxu0 0.0
        %2373 = vmatpush1.msra.mxu0 0.0
        %2374 = vmatprep.subr.mxu0 0.0
        %2375 = vmatpush1.msra.mxu0 0.0
        %2376 = vmatprep.subr.mxu0 0.0
        %2377 = vmatpush1.msra.mxu0 0.0
        %2378 = vmatprep.subr.mxu0 0.0
        %2379 = vmatpush1.msra.mxu0 0.0
        %2380 = vmatprep.subr.mxu0 0.0
        %2381 = vmatpush1.msra.mxu0 0.0
        %2382 = vmatprep.subr.mxu0 0.0
        %2383 = vmatpush1.msra.mxu0 0.0
        %2384 = vmatprep.subr.mxu0 0.0
        %2385 = vmatpush1.msra.mxu0 0.0
        %2386 = vmatprep.subr.mxu0 0.0
        %2387 = vmatpush1.msra.mxu0 0.0
        %2388 = vmatprep.mubr.f32.mxu0 0.0
        %2389 = vmatmul.mubr.f32.gmra.mrb[0].mxu0 %v2322
        %v2390 = vpop.f32.mrb[0].mxu0
        %v2391 = vadd.f32 0.0, %v2390
        %v2392 = vpop.f32.mrb[0].mxu0
        %2393 = vdwg.mxu0
        %v2395 = vsel %vm1303, %v1883, 0
        %2397 = vmatprep.subr.mxu0 0.0
        %2398 = vmatpush1.msra.mxu0 %v679
        %2399 = vmatprep.subr.mxu0 0.0
        %2400 = vmatpush1.msra.mxu0 0.0
        %2401 = vmatprep.subr.mxu0 0.0
        %2402 = vmatpush1.msra.mxu0 0.0
        %2403 = vmatprep.subr.mxu0 0.0
        %2404 = vmatpush1.msra.mxu0 0.0
        %2405 = vmatprep.subr.mxu0 0.0
        %2406 = vmatpush1.msra.mxu0 0.0
        %2407 = vmatprep.subr.mxu0 0.0
        %2408 = vmatpush1.msra.mxu0 0.0
        %2409 = vmatprep.subr.mxu0 0.0
        %2410 = vmatpush1.msra.mxu0 0.0
        %2411 = vmatprep.subr.mxu0 0.0
        %2412 = vmatpush1.msra.mxu0 0.0
        %2413 = vmatprep.subr.mxu0 0.0
        %2414 = vmatpush1.msra.mxu0 0.0
        %2415 = vmatprep.subr.mxu0 0.0
        %2416 = vmatpush1.msra.mxu0 0.0
        %2417 = vmatprep.subr.mxu0 0.0
        %2418 = vmatpush1.msra.mxu0 0.0
        %2419 = vmatprep.subr.mxu0 0.0
        %2420 = vmatpush1.msra.mxu0 0.0
        %2421 = vmatprep.subr.mxu0 0.0
        %2422 = vmatpush1.msra.mxu0 0.0
        %2423 = vmatprep.subr.mxu0 0.0
        %2424 = vmatpush1.msra.mxu0 0.0
        %2425 = vmatprep.subr.mxu0 0.0
        %2426 = vmatpush1.msra.mxu0 0.0
        %2427 = vmatprep.subr.mxu0 0.0
        %2428 = vmatpush1.msra.mxu0 0.0
        %2429 = vmatprep.subr.mxu0 0.0
        %2430 = vmatpush1.msra.mxu0 0.0
        %2431 = vmatprep.subr.mxu0 0.0
        %2432 = vmatpush1.msra.mxu0 0.0
        %2433 = vmatprep.subr.mxu0 0.0
        %2434 = vmatpush1.msra.mxu0 0.0
        %2435 = vmatprep.subr.mxu0 0.0
        %2436 = vmatpush1.msra.mxu0 0.0
        %2437 = vmatprep.subr.mxu0 0.0
        %2438 = vmatpush1.msra.mxu0 0.0
        %2439 = vmatprep.subr.mxu0 0.0
        %2440 = vmatpush1.msra.mxu0 0.0
        %2441 = vmatprep.subr.mxu0 0.0
        %2442 = vmatpush1.msra.mxu0 0.0
        %2443 = vmatprep.subr.mxu0 0.0
        %2444 = vmatpush1.msra.mxu0 0.0
        %2445 = vmatprep.subr.mxu0 0.0
        %2446 = vmatpush1.msra.mxu0 0.0
        %2447 = vmatprep.subr.mxu0 0.0
        %2448 = vmatpush1.msra.mxu0 0.0
        %2449 = vmatprep.subr.mxu0 0.0
        %2450 = vmatpush1.msra.mxu0 0.0
        %2451 = vmatprep.subr.mxu0 0.0
        %2452 = vmatpush1.msra.mxu0 0.0
        %2453 = vmatprep.subr.mxu0 0.0
        %2454 = vmatpush1.msra.mxu0 0.0
        %2455 = vmatprep.subr.mxu0 0.0
        %2456 = vmatpush1.msra.mxu0 0.0
        %2457 = vmatprep.subr.mxu0 0.0
        %2458 = vmatpush1.msra.mxu0 0.0
        %2459 = vmatprep.subr.mxu0 0.0
        %2460 = vmatpush1.msra.mxu0 0.0
        %2461 = vmatprep.mubr.f32.mxu0 0.0
        %2462 = vmatmul.mubr.f32.gmra.mrb[0].mxu0 %v2395
        %v2463 = vpop.f32.mrb[0].mxu0
        %v2464 = vadd.f32 0.0, %v2463
        %v2465 = vpop.f32.mrb[0].mxu0
        %2466 = vdwg.mxu0
        %v2468 = vsel %vm1303, %v1953, 0
        %2470 = vmatprep.subr.mxu0 0.0
        %2471 = vmatpush1.msra.mxu0 %v684
        %2472 = vmatprep.subr.mxu0 0.0
        %2473 = vmatpush1.msra.mxu0 0.0
        %2474 = vmatprep.subr.mxu0 0.0
        %2475 = vmatpush1.msra.mxu0 0.0
        %2476 = vmatprep.subr.mxu0 0.0
        %2477 = vmatpush1.msra.mxu0 0.0
        %2478 = vmatprep.subr.mxu0 0.0
        %2479 = vmatpush1.msra.mxu0 0.0
        %2480 = vmatprep.subr.mxu0 0.0
        %2481 = vmatpush1.msra.mxu0 0.0
        %2482 = vmatprep.subr.mxu0 0.0
        %2483 = vmatpush1.msra.mxu0 0.0
        %2484 = vmatprep.subr.mxu0 0.0
        %2485 = vmatpush1.msra.mxu0 0.0
        %2486 = vmatprep.subr.mxu0 0.0
        %2487 = vmatpush1.msra.mxu0 0.0
        %2488 = vmatprep.subr.mxu0 0.0
        %2489 = vmatpush1.msra.mxu0 0.0
        %2490 = vmatprep.subr.mxu0 0.0
        %2491 = vmatpush1.msra.mxu0 0.0
        %2492 = vmatprep.subr.mxu0 0.0
        %2493 = vmatpush1.msra.mxu0 0.0
        %2494 = vmatprep.subr.mxu0 0.0
        %2495 = vmatpush1.msra.mxu0 0.0
        %2496 = vmatprep.subr.mxu0 0.0
        %2497 = vmatpush1.msra.mxu0 0.0
        %2498 = vmatprep.subr.mxu0 0.0
        %2499 = vmatpush1.msra.mxu0 0.0
        %2500 = vmatprep.subr.mxu0 0.0
        %2501 = vmatpush1.msra.mxu0 0.0
        %2502 = vmatprep.subr.mxu0 0.0
        %2503 = vmatpush1.msra.mxu0 0.0
        %2504 = vmatprep.subr.mxu0 0.0
        %2505 = vmatpush1.msra.mxu0 0.0
        %2506 = vmatprep.subr.mxu0 0.0
        %2507 = vmatpush1.msra.mxu0 0.0
        %2508 = vmatprep.subr.mxu0 0.0
        %2509 = vmatpush1.msra.mxu0 0.0
        %2510 = vmatprep.subr.mxu0 0.0
        %2511 = vmatpush1.msra.mxu0 0.0
        %2512 = vmatprep.subr.mxu0 0.0
        %2513 = vmatpush1.msra.mxu0 0.0
        %2514 = vmatprep.subr.mxu0 0.0
        %2515 = vmatpush1.msra.mxu0 0.0
        %2516 = vmatprep.subr.mxu0 0.0
        %2517 = vmatpush1.msra.mxu0 0.0
        %2518 = vmatprep.subr.mxu0 0.0
        %2519 = vmatpush1.msra.mxu0 0.0
        %2520 = vmatprep.subr.mxu0 0.0
        %2521 = vmatpush1.msra.mxu0 0.0
        %2522 = vmatprep.subr.mxu0 0.0
        %2523 = vmatpush1.msra.mxu0 0.0
        %2524 = vmatprep.subr.mxu0 0.0
        %2525 = vmatpush1.msra.mxu0 0.0
        %2526 = vmatprep.subr.mxu0 0.0
        %2527 = vmatpush1.msra.mxu0 0.0
        %2528 = vmatprep.subr.mxu0 0.0
        %2529 = vmatpush1.msra.mxu0 0.0
        %2530 = vmatprep.subr.mxu0 0.0
        %2531 = vmatpush1.msra.mxu0 0.0
        %2532 = vmatprep.subr.mxu0 0.0
        %2533 = vmatpush1.msra.mxu0 0.0
        %2534 = vmatprep.mubr.f32.mxu0 0.0
        %2535 = vmatmul.mubr.f32.gmra.mrb[0].mxu0 %v2468
        %v2536 = vpop.f32.mrb[0].mxu0
        %v2537 = vadd.f32 0.0, %v2536
        %v2538 = vpop.f32.mrb[0].mxu0
        %2539 = vdwg.mxu0
        %v2548 = vrot.slane %v2099, 7
        %vm2549 = vcmask 1041409
        %v2550 = vsel %vm2549, %v2548, %v2026
        %v2551 = vrot.slane %v2172, 6
        %vm2552 = vcmask 1042434
        %v2553 = vsel %vm2552, %v2551, %v2550
        %v2554 = vrot.slane %v2245, 5
        %vm2555 = vcmask 1043459
        %v2556 = vsel %vm2555, %v2554, %v2553
        %v2557 = vrot.slane %v2318, 4
        %vm2558 = vcmask 1044484
        %v2559 = vsel %vm2558, %v2557, %v2556
        %v2560 = vrot.slane %v2391, 3
        %vm2561 = vcmask 1045509
        %v2562 = vsel %vm2561, %v2560, %v2559
        %v2563 = vrot.slane %v2464, 2
        %vm2564 = vcmask 1046534
        %v2565 = vsel %vm2564, %v2563, %v2562
        %v2566 = vrot.slane %v2537, 1
        %vm2567 = vcmask 1047559
        %v2568 = vsel %vm2567, %v2566, %v2565
        %2570 = vst.msk [vmem:[%s299] sm:$0xff] %vm325, %v2568
        %s2571 = sand.u32 %s203, 1
        %s2572 = scalar_lea.sflag [#allocation3], %s2571
        %s2573 = sand.u32 %s203, 1
        %s2574 = smul.addr %s2573, 8
        %s2575 = scalar_lea.vmem [#allocation2], %s2574
        // Predicated region
        $region53: #{soft_nsa_self_attention.1} parent=51 // pred_check
          %p2576 = pneg %p213
        $region54: #{soft_nsa_self_attention.1} parent=51 // pred_check_branch
          %2578 = sbr.rel (%p2576) target = $region56
        $region55: #{soft_nsa_self_attention.1} parent=51 // pred_region
          %s2580 = ssub.s32 128, 128
          %2581 = vsyncadd %s2572, %s2580
          %s2582 = smul.addr %s22, 128
          %s2583 = scalar_lea.hbm %s8, %s2582
          %s2585 = sshll.u32 %s2575, 4
          %s2586 = int_to_ptr.vmem [resolvable:$true] %s2585
          %2588 = dma.vmem_to_hbm [thread:$0]  %s2586, 128, %s2583, %s2572
        $region56: #{soft_nsa_self_attention.1} parent=51 // pred_fallthru
          _
      $region52: #{soft_nsa_self_attention.1} parent=5 // pred_fallthru
        _
      %p2589 = scmp.le.s32.totalorder 2, %s17
      // Predicated region
      $region57: #{soft_nsa_self_attention.1} parent=5 // pred_check
        %p2590 = pneg %p2589
      $region58: #{soft_nsa_self_attention.1} parent=5 // pred_check_branch
        %2592 = sbr.rel (%p2590) target = $region60
      $region59: #{soft_nsa_self_attention.1} parent=5 // pred_region
        %s2593 = ssub.s32 %s17, 2
        // Predicated region
        $region61: #{soft_nsa_self_attention.1} parent=59 // pred_check
          %p2594 = pneg %p219
        $region62: #{soft_nsa_self_attention.1} parent=59 // pred_check_branch
          %2596 = sbr.rel (%p2594) target = $region64
        $region63: #{soft_nsa_self_attention.1} parent=59 // pred_region
          %s2597 = sand.u32 %s204, 1
          %s2598 = scalar_lea.sflag [#allocation3], %s2597
          %s2599 = sand.u32 %s204, 1
          %s2600 = smul.addr %s2599, 8
          %s2601 = scalar_lea.vmem [#allocation2], %s2600
          %2602 = dma.done %s2598, 128
        $region64: #{soft_nsa_self_attention.1} parent=59 // pred_fallthru
          _
      $region60: #{soft_nsa_self_attention.1} parent=5 // pred_fallthru
        _
    $region6: #{soft_nsa_self_attention.1} parent=1 // loop_footer
      %s21 = sadd.s32 1, %s17
    $region7: #{soft_nsa_self_attention.1} parent=1 // loop_footer_branch
      %16 = sbr.rel target = $region3
    $region8: #{soft_nsa_self_attention.1} parent=1 // loop_exit
      _
    %2603 = vsyncpa [#allocation3], 1
    %s2604 = scalar_lea.sflag [#allocation3], 1
    %2605 = vsyncpa %s2604, 1

</llo_original>
